<compile_context>
chip_gen: v6e
topology: v6e:2x2x1
jax: 0.10.0
libtpu: 0.0.40
codegen_flags: <defaults>
</compile_context>

<pallas_src>
import functools
import math

import jax
import jax.numpy as jnp
from jax.experimental import pallas as pl
from jax.experimental.pallas import tpu as pltpu


def _direct_sum_rff_kernel(x_ref, w_ref, b_ref, o_ref, *, scale, use_mxu):
    """For the current (N-tile, F-tile): o = scale * cos(x @ W + b)."""
    b = b_ref[...].astype(jnp.float32)               # (1, tf)

    if use_mxu:
        # Single-pass bf16 matmul with f32 accumulation (MXU push lands in the
        # vector-extended slot; does not compete with the cos VALU polynomial).
        z = jnp.dot(
            x_ref[...].astype(jnp.bfloat16),
            w_ref[...].astype(jnp.bfloat16),
            preferred_element_type=jnp.float32,
        )
    else:
        # D is tiny (< 8): a VPU broadcast multiply-add over D avoids a nearly
        # empty MXU contraction and keeps full f32 precision. D is static, so
        # the loop unrolls.
        x = x_ref[...].astype(jnp.float32)            # (tn, D)
        w = w_ref[...].astype(jnp.float32)            # (D, tf)
        d_total = x.shape[1]
        z = x[:, 0:1] * w[0:1, :]
        for d in range(1, d_total):
            z = z + x[:, d:d + 1] * w[d:d + 1, :]

    o_ref[...] = (scale * jnp.cos(z + b)).astype(o_ref.dtype)


def _round_up(x, m):
    return ((x + m - 1) // m) * m


def _direct_sum_rff_call(x, w_cat, b_cat, *, scale, tile_n, tile_f, out_dtype):
    """x: (N, D), w_cat: (D, Ftot), b_cat: (1, Ftot) -> (N, Ftot)."""
    N, D = x.shape
    Ftot = w_cat.shape[1]

    # Fixed (8,128)-aligned tiles, clamped to the (rounded-up) array extents;
    # cdiv grid lets Pallas mask the ragged edge blocks.
    tn = min(tile_n, _round_up(N, 8))
    tf = min(tile_f, _round_up(Ftot, 128))
    grid_n = pl.cdiv(N, tn)
    grid_f = pl.cdiv(Ftot, tf)

    use_mxu = D >= 8

    # Grid ordering:
    #   default: F outer, N inner -> weight/bias tile is invariant across the
    #   inner N steps (streamed from HBM once per F tile).
    #   If the F axis has only one block, make N the leading parallel axis so
    #   megacore sharding (v7x, 2 TCs) still gets >=2 blocks to split.
    if grid_f >= 2:
        grid = (grid_f, grid_n)
        x_map = lambda j, i: (i, 0)
        w_map = lambda j, i: (0, j)
        b_map = lambda j, i: (0, j)
        o_map = lambda j, i: (i, j)
    else:
        grid = (grid_n, grid_f)
        x_map = lambda i, j: (i, 0)
        w_map = lambda i, j: (0, j)
        b_map = lambda i, j: (0, j)
        o_map = lambda i, j: (i, j)

    # Tight, tile-derived VMEM limit (double-buffered inputs + output) plus
    # margin for Mosaic internal scratch. Keeps headroom on v7x's 64 MiB VMEM.
    tile_bytes = 4 * (tn * D + D * tf + tf + tn * tf)
    vmem_limit = int(min(100 * 1024 * 1024,
                         max(8 * 1024 * 1024, 2 * tile_bytes + 4 * 1024 * 1024)))

    kernel = functools.partial(_direct_sum_rff_kernel, scale=scale, use_mxu=use_mxu)

    cost = pl.CostEstimate(
        flops=2 * N * D * Ftot,
        transcendentals=N * Ftot,
        bytes_accessed=4 * (N * D + D * Ftot + Ftot) + jnp.dtype(out_dtype).itemsize * N * Ftot,
    )

    return pl.pallas_call(
        kernel,
        out_shape=jax.ShapeDtypeStruct((N, Ftot), out_dtype),
        grid_spec=pltpu.PrefetchScalarGridSpec(
            num_scalar_prefetch=0,
            grid=grid,
            in_specs=[
                pl.BlockSpec((tn, D), x_map),   # x tile: depends only on N index
                pl.BlockSpec((D, tf), w_map),   # concatenated weight tile
                pl.BlockSpec((1, tf), b_map),   # concatenated bias tile
            ],
            out_specs=pl.BlockSpec((tn, tf), o_map),
        ),
        compiler_params=pltpu.CompilerParams(
            dimension_semantics=("parallel", "parallel"),
            vmem_limit_bytes=vmem_limit,
        ),
        cost_estimate=cost,
    )(x, w_cat, b_cat)


def make_direct_sum_feature_map(weights, biases, *, tile_n=512, tile_f=2048,
                                out_dtype=None):
    """Build the fused direct-sum RFF map once (hoists the weight concat out of
    the hot path) and return a jitted apply(x) closure.

    weights: (K, D, F); biases: (K, F).  apply(x): (N, D) -> (N, K*F).
    `out_dtype=jnp.bfloat16` halves output HBM traffic on bandwidth-bound chips.
    """
    K, D, F = weights.shape
    assert biases.shape == (K, F)
    scale = math.sqrt(2.0 / F)  # per-map RFF scale; all constituents share F

    # Concatenation along the feature axis == one wide linear layer. Done ONCE
    # here (not per call): avoids re-writing D*K*F*4 bytes of HBM every call.
    w_cat = jnp.transpose(weights, (1, 0, 2)).reshape(D, K * F)   # (D, K*F)
    b_cat = biases.reshape(1, K * F)                              # (1, K*F)

    def apply(x):
        dt = out_dtype if out_dtype is not None else x.dtype
        return _direct_sum_rff_call(x, w_cat, b_cat, scale=scale,
                                    tile_n=tile_n, tile_f=tile_f, out_dtype=dt)

    return jax.jit(apply)


def direct_sum_feature_map(x, weights, biases, *, tile_n=512, tile_f=2048,
                           out_dtype=None):
    """One-shot convenience wrapper (prefer make_direct_sum_feature_map)."""
    return make_direct_sum_feature_map(weights, biases, tile_n=tile_n,
                                       tile_f=tile_f, out_dtype=out_dtype)(x)


def reference(x, weights, biases):
    """Pure-JAX reference: concat_k sqrt(2/F) * cos(x @ W_k + b_k)."""
    K, D, F = weights.shape
    scale = math.sqrt(2.0 / F)
    feats = [scale * jnp.cos(x @ weights[k] + biases[k][None, :]) for k in range(K)]
    return jnp.concatenate(feats, axis=-1)


if __name__ == "__main__":
    # Small deterministic shapes: N=16 points, D=4 input dims,
    # K=3 constituent feature maps, F=256 Fourier features each -> out (16, 768).
    N, D, K, F = 16, 4, 3, 256

    key = jax.random.PRNGKey(0)
    kx, kw, kb = jax.random.split(key, 3)
    x = jax.random.normal(kx, (N, D), dtype=jnp.float32)
    weights = jax.random.normal(kw, (K, D, F), dtype=jnp.float32)
    biases = jax.random.uniform(kb, (K, F), dtype=jnp.float32,
                                minval=0.0, maxval=2.0 * math.pi)

    fmap = make_direct_sum_feature_map(weights, biases)
    out = jax.block_until_ready(fmap(x))

    ref = reference(x, weights, biases)
    assert out.shape == (N, K * F), out.shape
    assert jnp.allclose(out, ref, atol=1e-5, rtol=1e-5), "mismatch vs reference"

    # Second check: ragged edge blocks on both axes (cdiv grid path).
    N2 = 20
    x2 = jax.random.normal(jax.random.PRNGKey(1), (N2, D), dtype=jnp.float32)
    out2 = jax.block_until_ready(
        direct_sum_feature_map(x2, weights, biases, tile_n=8, tile_f=512))
    ref2 = reference(x2, weights, biases)
    assert out2.shape == (N2, K * F), out2.shape
    assert jnp.allclose(out2, ref2, atol=1e-5, rtol=1e-5), "ragged-tile mismatch"

    print("KERNEL_OK")
</pallas_src>

<mosaic_0001>
module attributes {stable_mosaic.version = 11 : i64} {
  func.func @_direct_sum_rff_kernel(%arg0: i32, %arg1: i32, %arg2: memref<16x4xf32, #tpu.memory_space<vmem>>, %arg3: memref<4x768xf32, #tpu.memory_space<vmem>>, %arg4: memref<1x768xf32, #tpu.memory_space<vmem>>, %arg5: memref<16x768xf32, #tpu.memory_space<vmem>>) attributes {dimension_semantics = [#tpu.dimension_semantics<parallel>, #tpu.dimension_semantics<parallel>], iteration_bounds = array<i64: 1, 1>, scalar_prefetch = 0 : i64, scratch_operands = 0 : i64, tpu.core_type = #tpu.core_type<tc>, window_params = [{transform_indices = @transform_0, window_bounds = array<i64: 16, 4>}, {transform_indices = @transform_1, window_bounds = array<i64: 4, 768>}, {transform_indices = @transform_2, window_bounds = array<i64: 1, 768>}, {transform_indices = @transform_3, window_bounds = array<i64: 16, 768>}]} {
    %c0 = arith.constant 0 : index
    %c0_0 = arith.constant 0 : index
    %0 = vector.load %arg4[%c0, %c0_0] : memref<1x768xf32, #tpu.memory_space<vmem>>, vector<1x768xf32>
    %c0_1 = arith.constant 0 : index
    %c0_2 = arith.constant 0 : index
    %1 = vector.load %arg2[%c0_1, %c0_2] : memref<16x4xf32, #tpu.memory_space<vmem>>, vector<16x4xf32>
    %c0_3 = arith.constant 0 : index
    %c0_4 = arith.constant 0 : index
    %2 = vector.load %arg3[%c0_3, %c0_4] : memref<4x768xf32, #tpu.memory_space<vmem>>, vector<4x768xf32>
    %3 = vector.extract_strided_slice %1 {offsets = [0, 0], sizes = [16, 1], strides = [1, 1]} : vector<16x4xf32> to vector<16x1xf32>
    %4 = vector.extract_strided_slice %2 {offsets = [0, 0], sizes = [1, 768], strides = [1, 1]} : vector<4x768xf32> to vector<1x768xf32>
    %5 = vector.broadcast %3 : vector<16x1xf32> to vector<16x768xf32>
    %6 = vector.broadcast %4 : vector<1x768xf32> to vector<16x768xf32>
    %7 = arith.mulf %5, %6 : vector<16x768xf32>
    %8 = vector.extract_strided_slice %1 {offsets = [0, 1], sizes = [16, 1], strides = [1, 1]} : vector<16x4xf32> to vector<16x1xf32>
    %9 = vector.extract_strided_slice %2 {offsets = [1, 0], sizes = [1, 768], strides = [1, 1]} : vector<4x768xf32> to vector<1x768xf32>
    %10 = vector.broadcast %8 : vector<16x1xf32> to vector<16x768xf32>
    %11 = vector.broadcast %9 : vector<1x768xf32> to vector<16x768xf32>
    %12 = arith.mulf %10, %11 : vector<16x768xf32>
    %13 = arith.addf %7, %12 : vector<16x768xf32>
    %14 = vector.extract_strided_slice %1 {offsets = [0, 2], sizes = [16, 1], strides = [1, 1]} : vector<16x4xf32> to vector<16x1xf32>
    %15 = vector.extract_strided_slice %2 {offsets = [2, 0], sizes = [1, 768], strides = [1, 1]} : vector<4x768xf32> to vector<1x768xf32>
    %16 = vector.broadcast %14 : vector<16x1xf32> to vector<16x768xf32>
    %17 = vector.broadcast %15 : vector<1x768xf32> to vector<16x768xf32>
    %18 = arith.mulf %16, %17 : vector<16x768xf32>
    %19 = arith.addf %13, %18 : vector<16x768xf32>
    %20 = vector.extract_strided_slice %1 {offsets = [0, 3], sizes = [16, 1], strides = [1, 1]} : vector<16x4xf32> to vector<16x1xf32>
    %21 = vector.extract_strided_slice %2 {offsets = [3, 0], sizes = [1, 768], strides = [1, 1]} : vector<4x768xf32> to vector<1x768xf32>
    %22 = vector.broadcast %20 : vector<16x1xf32> to vector<16x768xf32>
    %23 = vector.broadcast %21 : vector<1x768xf32> to vector<16x768xf32>
    %24 = arith.mulf %22, %23 : vector<16x768xf32>
    %25 = arith.addf %19, %24 : vector<16x768xf32>
    %26 = vector.broadcast %0 : vector<1x768xf32> to vector<16x768xf32>
    %27 = arith.addf %25, %26 : vector<16x768xf32>
    %28 = math.cos %27 : vector<16x768xf32>
    %cst = arith.constant 0.0883883461 : f32
    %29 = vector.broadcast %cst : f32 to vector<16x768xf32>
    %30 = arith.mulf %29, %28 : vector<16x768xf32>
    %c0_5 = arith.constant 0 : index
    %c0_6 = arith.constant 0 : index
    %31 = vector.load %arg5[%c0_5, %c0_6] : memref<16x768xf32, #tpu.memory_space<vmem>>, vector<16x768xf32>
    tpu.vector_store %arg5[%c0_5, %c0_6], %30 {strides = array<i32>} : memref<16x768xf32, #tpu.memory_space<vmem>>, vector<16x768xf32>,
    return
  }
  func.func @transform_0(%arg0: i32, %arg1: i32) -> (i32, i32) {
    %c0_i32 = arith.constant 0 : i32
    %c0_i32_0 = arith.constant 0 : i32
    return %arg0, %c0_i32 : i32, i32
  }
  func.func @transform_1(%arg0: i32, %arg1: i32) -> (i32, i32) {
    %c0_i32 = arith.constant 0 : i32
    %c0_i32_0 = arith.constant 0 : i32
    return %c0_i32, %arg1 : i32, i32
  }
  func.func @transform_2(%arg0: i32, %arg1: i32) -> (i32, i32) {
    %c0_i32 = arith.constant 0 : i32
    %c0_i32_0 = arith.constant 0 : i32
    return %c0_i32, %arg1 : i32, i32
  }
  func.func @transform_3(%arg0: i32, %arg1: i32) -> (i32, i32) {
    %c0_i32 = arith.constant 0 : i32
    return %arg0, %arg1 : i32, i32
  }
}

</mosaic_0001>

<llo_original>
// kernel: apply.1
$region0: #{apply.1}
  #allocation0 [shape = 'u32[]', space=smem, size = 0x4, offset = 0x4, fixed_abs, tag = 'smem constant byte address 0x4 - core index']
  #allocation1 [shape = 'u32[144,128]{1,0:T(1,128)}', space=vmem, size = 0x12000, scoped, tag = 'internal scratch']
  %s0 = inlined_call_operand.vmem [shape: f32[16,4], index: 0, kind: input, shape index: {}]
  %s1 = inlined_call_operand.hbm [shape: f32[4,768], index: 1, kind: input, shape index: {}]
  %s2 = inlined_call_operand.vmem [shape: f32[1,768], index: 2, kind: input, shape index: {}]
  %s3 = inlined_call_operand.hbm [shape: f32[16,768], index: 3, kind: output, shape index: {}]
  %s4 = sld [smem:[#allocation0]]
  $region26: #{apply.1} parent=0
    _
  %s6 = ssub.s32 1, %s4
  %s7 = scalar_select 0, %s6, %s4
  $region1: #{apply.1} parent=0
    #allocation2 [shape = 'u8[12288]{0}', space=vmem, size = 0x3000, scoped, tag = 'input window, operand 1, single buffered']
    #allocation3 [shape = 's32[1]{0}', space=sflag, size = 0x4, scoped, tag = 'scoped memory for apply.1']
    #allocation4 [shape = 's32[1]{0}', space=sflag, size = 0x4, scoped, tag = 'scoped memory for apply.1']
    #allocation5 [shape = 'u8[49152]{0}', space=vmem, size = 0xc000, scoped, tag = 'output window, operand 0, single buffered']
    %8 = vsyncpa [#allocation3], 0
    %9 = vsyncpa [#allocation4], 0
    // Predicated region
    $region2: #{apply.1} parent=1 // pred_check
      _
    $region3: #{apply.1} parent=1 // pred_check_branch
      %11 = sbr.rel (0) target = $region5
    $region4: #{apply.1} parent=1 // pred_region
      _
    $region5: #{apply.1} parent=1 // pred_fallthru
      _
    // Predicated region
    $region6: #{apply.1} parent=1 // pred_check
      _
    $region7: #{apply.1} parent=1 // pred_check_branch
      %13 = sbr.rel (0) target = $region9
    $region8: #{apply.1} parent=1 // pred_region
      %s15 = ssub.s32 384, 384
      %16 = vsyncadd [#allocation3], %s15
      %s18 = sshll.u32 [#allocation2], 4
      %s19 = int_to_ptr.vmem [resolvable:$true] %s18
      %21 = dma.hbm_to_vmem [thread:$0]  %s1, 384, %s19, [#allocation3]
    $region9: #{apply.1} parent=1 // pred_fallthru
      _
    // Predicated region
    $region10: #{apply.1} parent=1 // pred_check
      _
    $region11: #{apply.1} parent=1 // pred_check_branch
      %23 = sbr.rel (0) target = $region13
    $region12: #{apply.1} parent=1 // pred_region
      _
    $region13: #{apply.1} parent=1 // pred_fallthru
      _
    // Predicated region
    $region14: #{apply.1} parent=1 // pred_check
      _
    $region15: #{apply.1} parent=1 // pred_check_branch
      %25 = sbr.rel (0) target = $region17
    $region16: #{apply.1} parent=1 // pred_region
      %26 = dma.done [#allocation3], 384
    $region17: #{apply.1} parent=1 // pred_fallthru
      _
    %v27 = vld [vmem:[%s2] sm:$0x3f]
    %v28 = vld [vmem:[%s0] sm:$0xff]
    %v29 = vld [vmem:[%s0 + $0x8] sm:$0xff]
    %v30 = vld [vmem:[#allocation2] sm:$0xff]
    %v31 = vld [vmem:[#allocation2 + $0x8] sm:$0xff]
    %v32 = vld [vmem:[#allocation2 + $0x10] sm:$0xff]
    %34 = vset.pattern.permute.xlu0 0
    %35 = vperm.xlu0 %34, %v28
    %v36 = vpop.permute.xlu0 %35
    %39 = vset.pattern.permute.xlu0 0
    %40 = vperm.xlu0 %39, %v29
    %v41 = vpop.permute.xlu0 %40
    %v46 = vlaneseq
    %v47 = vshrl.u32 %v46, 7
    %v48 = vsub.s32 0, %v47
    %v49 = vrot.slane %v30, %v48
    %v50 = vlaneseq
    %v51 = vshrl.u32 %v50, 7
    %v52 = vsub.s32 4, %v51
    %v53 = vrot.slane %v30, %v52
    %v54 = vlaneseq
    %v55 = vshrl.u32 %v54, 7
    %v56 = vsub.s32 0, %v55
    %v57 = vrot.slane %v31, %v56
    %v58 = vlaneseq
    %v59 = vshrl.u32 %v58, 7
    %v60 = vsub.s32 4, %v59
    %v61 = vrot.slane %v31, %v60
    %v62 = vlaneseq
    %v63 = vshrl.u32 %v62, 7
    %v64 = vsub.s32 0, %v63
    %v65 = vrot.slane %v32, %v64
    %v66 = vlaneseq
    %v67 = vshrl.u32 %v66, 7
    %v68 = vsub.s32 4, %v67
    %v69 = vrot.slane %v32, %v68
    %v76 = vlaneseq
    %v77 = vshrl.u32 %v76, 7
    %v78 = vsub.s32 0, %v77
    %v79 = vrot.slane %v49, %v78
    %v80 = vlaneseq
    %v81 = vshrl.u32 %v80, 7
    %v82 = vsub.s32 0, %v81
    %v83 = vrot.slane %v53, %v82
    %v84 = vlaneseq
    %v85 = vshrl.u32 %v84, 7
    %v86 = vsub.s32 0, %v85
    %v87 = vrot.slane %v57, %v86
    %v88 = vlaneseq
    %v89 = vshrl.u32 %v88, 7
    %v90 = vsub.s32 0, %v89
    %v91 = vrot.slane %v61, %v90
    %v92 = vlaneseq
    %v93 = vshrl.u32 %v92, 7
    %v94 = vsub.s32 0, %v93
    %v95 = vrot.slane %v65, %v94
    %v96 = vlaneseq
    %v97 = vshrl.u32 %v96, 7
    %v98 = vsub.s32 0, %v97
    %v99 = vrot.slane %v69, %v98
    %v100 = vmul.f32 %v36, %v79
    %v101 = vmul.f32 %v36, %v83
    %v102 = vmul.f32 %v36, %v87
    %v103 = vmul.f32 %v36, %v91
    %v104 = vmul.f32 %v36, %v95
    %v105 = vmul.f32 %v36, %v99
    %v106 = vmul.f32 %v41, %v79
    %v107 = vmul.f32 %v41, %v83
    %v108 = vmul.f32 %v41, %v87
    %v109 = vmul.f32 %v41, %v91
    %v110 = vmul.f32 %v41, %v95
    %v111 = vmul.f32 %v41, %v99
    %112 = vset.pattern.permute.xlu0 1
    %113 = vperm.xlu0 %112, %v28
    %v114 = vpop.permute.xlu0 %113
    %116 = vset.pattern.permute.xlu0 1
    %117 = vperm.xlu0 %116, %v29
    %v118 = vpop.permute.xlu0 %117
    %v120 = vlaneseq
    %v121 = vshrl.u32 %v120, 7
    %v122 = vsub.s32 1, %v121
    %v123 = vrot.slane %v30, %v122
    %v124 = vlaneseq
    %v125 = vshrl.u32 %v124, 7
    %v126 = vsub.s32 5, %v125
    %v127 = vrot.slane %v30, %v126
    %v128 = vlaneseq
    %v129 = vshrl.u32 %v128, 7
    %v130 = vsub.s32 1, %v129
    %v131 = vrot.slane %v31, %v130
    %v132 = vlaneseq
    %v133 = vshrl.u32 %v132, 7
    %v134 = vsub.s32 5, %v133
    %v135 = vrot.slane %v31, %v134
    %v136 = vlaneseq
    %v137 = vshrl.u32 %v136, 7
    %v138 = vsub.s32 1, %v137
    %v139 = vrot.slane %v32, %v138
    %v140 = vlaneseq
    %v141 = vshrl.u32 %v140, 7
    %v142 = vsub.s32 5, %v141
    %v143 = vrot.slane %v32, %v142
    %v150 = vlaneseq
    %v151 = vshrl.u32 %v150, 7
    %v152 = vsub.s32 1, %v151
    %v153 = vrot.slane %v123, %v152
    %v154 = vlaneseq
    %v155 = vshrl.u32 %v154, 7
    %v156 = vsub.s32 1, %v155
    %v157 = vrot.slane %v127, %v156
    %v158 = vlaneseq
    %v159 = vshrl.u32 %v158, 7
    %v160 = vsub.s32 1, %v159
    %v161 = vrot.slane %v131, %v160
    %v162 = vlaneseq
    %v163 = vshrl.u32 %v162, 7
    %v164 = vsub.s32 1, %v163
    %v165 = vrot.slane %v135, %v164
    %v166 = vlaneseq
    %v167 = vshrl.u32 %v166, 7
    %v168 = vsub.s32 1, %v167
    %v169 = vrot.slane %v139, %v168
    %v170 = vlaneseq
    %v171 = vshrl.u32 %v170, 7
    %v172 = vsub.s32 1, %v171
    %v173 = vrot.slane %v143, %v172
    %v174 = vmul.f32 %v114, %v153
    %v175 = vmul.f32 %v114, %v157
    %v176 = vmul.f32 %v114, %v161
    %v177 = vmul.f32 %v114, %v165
    %v178 = vmul.f32 %v114, %v169
    %v179 = vmul.f32 %v114, %v173
    %v180 = vmul.f32 %v118, %v153
    %v181 = vmul.f32 %v118, %v157
    %v182 = vmul.f32 %v118, %v161
    %v183 = vmul.f32 %v118, %v165
    %v184 = vmul.f32 %v118, %v169
    %v185 = vmul.f32 %v118, %v173
    %v186 = vadd.f32 %v100, %v174
    %v187 = vadd.f32 %v101, %v175
    %v188 = vadd.f32 %v102, %v176
    %v189 = vadd.f32 %v103, %v177
    %v190 = vadd.f32 %v104, %v178
    %v191 = vadd.f32 %v105, %v179
    %v192 = vadd.f32 %v106, %v180
    %v193 = vadd.f32 %v107, %v181
    %v194 = vadd.f32 %v108, %v182
    %v195 = vadd.f32 %v109, %v183
    %v196 = vadd.f32 %v110, %v184
    %v197 = vadd.f32 %v111, %v185
    %198 = vset.pattern.permute.xlu0 2
    %199 = vperm.xlu0 %198, %v28
    %v200 = vpop.permute.xlu0 %199
    %202 = vset.pattern.permute.xlu0 2
    %203 = vperm.xlu0 %202, %v29
    %v204 = vpop.permute.xlu0 %203
    %v206 = vlaneseq
    %v207 = vshrl.u32 %v206, 7
    %v208 = vsub.s32 2, %v207
    %v209 = vrot.slane %v30, %v208
    %v210 = vlaneseq
    %v211 = vshrl.u32 %v210, 7
    %v212 = vsub.s32 6, %v211
    %v213 = vrot.slane %v30, %v212
    %v214 = vlaneseq
    %v215 = vshrl.u32 %v214, 7
    %v216 = vsub.s32 2, %v215
    %v217 = vrot.slane %v31, %v216
    %v218 = vlaneseq
    %v219 = vshrl.u32 %v218, 7
    %v220 = vsub.s32 6, %v219
    %v221 = vrot.slane %v31, %v220
    %v222 = vlaneseq
    %v223 = vshrl.u32 %v222, 7
    %v224 = vsub.s32 2, %v223
    %v225 = vrot.slane %v32, %v224
    %v226 = vlaneseq
    %v227 = vshrl.u32 %v226, 7
    %v228 = vsub.s32 6, %v227
    %v229 = vrot.slane %v32, %v228
    %v236 = vlaneseq
    %v237 = vshrl.u32 %v236, 7
    %v238 = vsub.s32 2, %v237
    %v239 = vrot.slane %v209, %v238
    %v240 = vlaneseq
    %v241 = vshrl.u32 %v240, 7
    %v242 = vsub.s32 2, %v241
    %v243 = vrot.slane %v213, %v242
    %v244 = vlaneseq
    %v245 = vshrl.u32 %v244, 7
    %v246 = vsub.s32 2, %v245
    %v247 = vrot.slane %v217, %v246
    %v248 = vlaneseq
    %v249 = vshrl.u32 %v248, 7
    %v250 = vsub.s32 2, %v249
    %v251 = vrot.slane %v221, %v250
    %v252 = vlaneseq
    %v253 = vshrl.u32 %v252, 7
    %v254 = vsub.s32 2, %v253
    %v255 = vrot.slane %v225, %v254
    %v256 = vlaneseq
    %v257 = vshrl.u32 %v256, 7
    %v258 = vsub.s32 2, %v257
    %v259 = vrot.slane %v229, %v258
    %v260 = vmul.f32 %v200, %v239
    %v261 = vmul.f32 %v200, %v243
    %v262 = vmul.f32 %v200, %v247
    %v263 = vmul.f32 %v200, %v251
    %v264 = vmul.f32 %v200, %v255
    %v265 = vmul.f32 %v200, %v259
    %v266 = vmul.f32 %v204, %v239
    %v267 = vmul.f32 %v204, %v243
    %v268 = vmul.f32 %v204, %v247
    %v269 = vmul.f32 %v204, %v251
    %v270 = vmul.f32 %v204, %v255
    %v271 = vmul.f32 %v204, %v259
    %v272 = vadd.f32 %v186, %v260
    %v273 = vadd.f32 %v187, %v261
    %v274 = vadd.f32 %v188, %v262
    %v275 = vadd.f32 %v189, %v263
    %v276 = vadd.f32 %v190, %v264
    %v277 = vadd.f32 %v191, %v265
    %v278 = vadd.f32 %v192, %v266
    %v279 = vadd.f32 %v193, %v267
    %v280 = vadd.f32 %v194, %v268
    %v281 = vadd.f32 %v195, %v269
    %v282 = vadd.f32 %v196, %v270
    %v283 = vadd.f32 %v197, %v271
    %284 = vset.pattern.permute.xlu0 3
    %285 = vperm.xlu0 %284, %v28
    %v286 = vpop.permute.xlu0 %285
    %288 = vset.pattern.permute.xlu0 3
    %289 = vperm.xlu0 %288, %v29
    %v290 = vpop.permute.xlu0 %289
    %v292 = vlaneseq
    %v293 = vshrl.u32 %v292, 7
    %v294 = vsub.s32 3, %v293
    %v295 = vrot.slane %v30, %v294
    %v296 = vlaneseq
    %v297 = vshrl.u32 %v296, 7
    %v298 = vsub.s32 7, %v297
    %v299 = vrot.slane %v30, %v298
    %v300 = vlaneseq
    %v301 = vshrl.u32 %v300, 7
    %v302 = vsub.s32 3, %v301
    %v303 = vrot.slane %v31, %v302
    %v304 = vlaneseq
    %v305 = vshrl.u32 %v304, 7
    %v306 = vsub.s32 7, %v305
    %v307 = vrot.slane %v31, %v306
    %v308 = vlaneseq
    %v309 = vshrl.u32 %v308, 7
    %v310 = vsub.s32 3, %v309
    %v311 = vrot.slane %v32, %v310
    %v312 = vlaneseq
    %v313 = vshrl.u32 %v312, 7
    %v314 = vsub.s32 7, %v313
    %v315 = vrot.slane %v32, %v314
    %v322 = vlaneseq
    %v323 = vshrl.u32 %v322, 7
    %v324 = vsub.s32 3, %v323
    %v325 = vrot.slane %v295, %v324
    %v326 = vlaneseq
    %v327 = vshrl.u32 %v326, 7
    %v328 = vsub.s32 3, %v327
    %v329 = vrot.slane %v299, %v328
    %v330 = vlaneseq
    %v331 = vshrl.u32 %v330, 7
    %v332 = vsub.s32 3, %v331
    %v333 = vrot.slane %v303, %v332
    %v334 = vlaneseq
    %v335 = vshrl.u32 %v334, 7
    %v336 = vsub.s32 3, %v335
    %v337 = vrot.slane %v307, %v336
    %v338 = vlaneseq
    %v339 = vshrl.u32 %v338, 7
    %v340 = vsub.s32 3, %v339
    %v341 = vrot.slane %v311, %v340
    %v342 = vlaneseq
    %v343 = vshrl.u32 %v342, 7
    %v344 = vsub.s32 3, %v343
    %v345 = vrot.slane %v315, %v344
    %v346 = vmul.f32 %v286, %v325
    %v347 = vmul.f32 %v286, %v329
    %v348 = vmul.f32 %v286, %v333
    %v349 = vmul.f32 %v286, %v337
    %v350 = vmul.f32 %v286, %v341
    %v351 = vmul.f32 %v286, %v345
    %v352 = vmul.f32 %v290, %v325
    %v353 = vmul.f32 %v290, %v329
    %v354 = vmul.f32 %v290, %v333
    %v355 = vmul.f32 %v290, %v337
    %v356 = vmul.f32 %v290, %v341
    %v357 = vmul.f32 %v290, %v345
    %v358 = vadd.f32 %v272, %v346
    %v359 = vadd.f32 %v273, %v347
    %v360 = vadd.f32 %v274, %v348
    %v361 = vadd.f32 %v275, %v349
    %v362 = vadd.f32 %v276, %v350
    %v363 = vadd.f32 %v277, %v351
    %v364 = vadd.f32 %v278, %v352
    %v365 = vadd.f32 %v279, %v353
    %v366 = vadd.f32 %v280, %v354
    %v367 = vadd.f32 %v281, %v355
    %v368 = vadd.f32 %v282, %v356
    %v369 = vadd.f32 %v283, %v357
    %v371 = vlaneseq
    %v372 = vshrl.u32 %v371, 7
    %v373 = vsub.s32 0, %v372
    %v374 = vrot.slane %v27, %v373
    %v375 = vlaneseq
    %v376 = vshrl.u32 %v375, 7
    %v377 = vsub.s32 1, %v376
    %v378 = vrot.slane %v27, %v377
    %v379 = vlaneseq
    %v380 = vshrl.u32 %v379, 7
    %v381 = vsub.s32 2, %v380
    %v382 = vrot.slane %v27, %v381
    %v383 = vlaneseq
    %v384 = vshrl.u32 %v383, 7
    %v385 = vsub.s32 3, %v384
    %v386 = vrot.slane %v27, %v385
    %v387 = vlaneseq
    %v388 = vshrl.u32 %v387, 7
    %v389 = vsub.s32 4, %v388
    %v390 = vrot.slane %v27, %v389
    %v391 = vlaneseq
    %v392 = vshrl.u32 %v391, 7
    %v393 = vsub.s32 5, %v392
    %v394 = vrot.slane %v27, %v393
    %v401 = vadd.f32 %v358, %v374
    %v402 = vadd.f32 %v359, %v378
    %v403 = vadd.f32 %v360, %v382
    %v404 = vadd.f32 %v361, %v386
    %v405 = vadd.f32 %v362, %v390
    %v406 = vadd.f32 %v363, %v394
    %v407 = vadd.f32 %v364, %v374
    %v408 = vadd.f32 %v365, %v378
    %v409 = vadd.f32 %v366, %v382
    %v410 = vadd.f32 %v367, %v386
    %v411 = vadd.f32 %v368, %v390
    %v412 = vadd.f32 %v369, %v394
    %v413 = vand.u32 2147483647, %v401
    %vm414 = vcmp.le.f32.partialorder %v413, 0.7853982
    %vm415 = vcmp.lt.s32.totalorder %v401, 0
    %v416 = vand.u32 %v401, 2139095040
    %v417 = vshrl.u32 %v416, 23
    %v418 = vsub.s32 %v417, 127
    %v419 = vand.u32 2147483647, %v401
    %v420 = vand.u32 %v419, 8388607
    %v421 = vor.u32 %v420, 8388608
    %v422 = vsub.s32 0, %v421
    %v423 = vadd.s32 %v418, 1
    %vm424 = vcmp.gt.s32.totalorder %v423, 0
    %v425 = vsel %vm424, %v423, 0
    %v426 = vshrl.u32 %v425, 5
    %v427 = vand.u32 %v425, 31
    %v428 = vsub.s32 32, %v427
    %v429 = vshrl.u32 683565275, %v428
    %v430 = vshll.u32 683565275, %v427
    %v431 = vshrl.u32 2475754826, %v428
    %v432 = vor.u32 %v430, %v431
    %v433 = vshll.u32 2475754826, %v427
    %v434 = vshrl.u32 2131351028, %v428
    %v435 = vor.u32 %v433, %v434
    %v436 = vshll.u32 2131351028, %v427
    %v437 = vshrl.u32 2102212464, %v428
    %v438 = vor.u32 %v436, %v437
    %v439 = vshll.u32 2102212464, %v427
    %v440 = vshrl.u32 920167782, %v428
    %v441 = vor.u32 %v439, %v440
    %v442 = vshll.u32 920167782, %v427
    %v443 = vshrl.u32 1326507024, %v428
    %v444 = vor.u32 %v442, %v443
    %vm445 = vcmp.lt.s32.totalorder %v426, 1
    %vm446 = vcmp.lt.s32.totalorder %v426, 2
    %vm447 = vcmp.lt.s32.totalorder %v426, 3
    %vm448 = vcmp.lt.s32.totalorder %v426, 4
    %v449 = vsel %vm445, %v429, %v432
    %v450 = vsel %vm448, %v438, 2102212464
    %v451 = vsel %vm447, %v435, %v450
    %v452 = vsel %vm446, %v449, %v451
    %v453 = vsel %vm445, %v432, %v435
    %v454 = vsel %vm448, %v441, 920167782
    %v455 = vsel %vm447, %v438, %v454
    %v456 = vsel %vm446, %v453, %v455
    %v457 = vsel %vm445, %v435, %v438
    %v458 = vsel %vm448, %v444, 1326507024
    %v459 = vsel %vm447, %v441, %v458
    %v460 = vsel %vm446, %v457, %v459
    %v461 = vshll.u32 %v421, 8
    %v462 = vmul.u32.u64.compose %v461, %v460
    %v463 = vextract.low.u32 %v462
    %v464 = vextract.high.u32 %v462
    %v465 = vmul.u32.u64.compose %v461, %v456
    %v466 = vextract.low.u32 %v465
    %v467 = vextract.high.u32 %v465
    %v468 = vmul.u32 %v461, %v452
    %v469 = vadd.s32 %v464, %v466
    %vm470 = vc.u32 %v464, %v466
    %v471 = vadd.s32 %v467, 1
    %v472 = vsel %vm470, %v471, %v467
    %v473 = vadd.s32 %v468, %v472
    %v474 = vadd.s32 %v473, 536870912
    %v475 = vshrl.u32 %v474, 30
    %v476 = vshll.u32 %v475, 30
    %v477 = vsub.s32 %v473, %v476
    %vm478 = vcmp.lt.s32.totalorder %v477, 0
    %v479 = vsub.s32 0, %v477
    %v480 = vsel %vm478, %v479, %v477
    %v481 = vclz %v480
    %v482 = vsub.s32 %v481, 2
    %vm483 = vcmp.gt.s32.totalorder 0, %v482
    %v484 = vsel %vm483, 0, %v482
    %v485 = vsub.s32 32, %v484
    %v486 = vshll.u32 %v477, %v484
    %v487 = vshrl.u32 %v469, %v485
    %v488 = vor.u32 %v486, %v487
    %v489 = vsub.s32 4294967266, %v484
    %v490 = vadd.s32 %v489, 127
    %v491 = vshll.u32 %v490, 23
    %v492 = vor.u32 4788187, %v491
    %v493 = vand.u32 2147483647, %v492
    %v495 = vcvt.s32.f32 %v488
    %v496 = vmul.f32 %v495, %v493
    %v497 = vxor.u32 %v496, 2147483648
    %v498 = vsel %vm415, %v497, %v496
    %v499 = vsub.s32 4, %v475
    %v500 = vsel %vm415, %v499, %v475
    %v501 = vsel %vm414, %v401, %v498
    %v502 = vsel %vm414, 0, %v500
    %v503 = vcosq.f32.pop %v501
    %v504 = vsinq.f32.pop %v501
    %vm505 = vweird.f32 %v401
    %v506 = vand.u32 %v502, 3
    %vm507 = vcmp.lt.s32.totalorder %v506, 2
    %vm508 = vcmp.eq.s32.totalorder %v506, 0
    %v509 = vxor.u32 %v504, 2147483648
    %v510 = vsel %vm508, %v503, %v509
    %vm511 = vcmp.eq.s32.totalorder %v506, 2
    %v512 = vxor.u32 %v503, 2147483648
    %v513 = vsel %vm511, %v512, %v504
    %v514 = vsel %vm507, %v510, %v513
    %v515 = vsel %vm505, nan, %v514
    %v516 = vand.u32 2147483647, %v402
    %vm517 = vcmp.le.f32.partialorder %v516, 0.7853982
    %vm518 = vcmp.lt.s32.totalorder %v402, 0
    %v519 = vand.u32 %v402, 2139095040
    %v520 = vshrl.u32 %v519, 23
    %v521 = vsub.s32 %v520, 127
    %v522 = vand.u32 2147483647, %v402
    %v523 = vand.u32 %v522, 8388607
    %v524 = vor.u32 %v523, 8388608
    %v525 = vsub.s32 0, %v524
    %v526 = vadd.s32 %v521, 1
    %vm527 = vcmp.gt.s32.totalorder %v526, 0
    %v528 = vsel %vm527, %v526, 0
    %v529 = vshrl.u32 %v528, 5
    %v530 = vand.u32 %v528, 31
    %v531 = vsub.s32 32, %v530
    %v532 = vshrl.u32 683565275, %v531
    %v533 = vshll.u32 683565275, %v530
    %v534 = vshrl.u32 2475754826, %v531
    %v535 = vor.u32 %v533, %v534
    %v536 = vshll.u32 2475754826, %v530
    %v537 = vshrl.u32 2131351028, %v531
    %v538 = vor.u32 %v536, %v537
    %v539 = vshll.u32 2131351028, %v530
    %v540 = vshrl.u32 2102212464, %v531
    %v541 = vor.u32 %v539, %v540
    %v542 = vshll.u32 2102212464, %v530
    %v543 = vshrl.u32 920167782, %v531
    %v544 = vor.u32 %v542, %v543
    %v545 = vshll.u32 920167782, %v530
    %v546 = vshrl.u32 1326507024, %v531
    %v547 = vor.u32 %v545, %v546
    %vm548 = vcmp.lt.s32.totalorder %v529, 1
    %vm549 = vcmp.lt.s32.totalorder %v529, 2
    %vm550 = vcmp.lt.s32.totalorder %v529, 3
    %vm551 = vcmp.lt.s32.totalorder %v529, 4
    %v552 = vsel %vm548, %v532, %v535
    %v553 = vsel %vm551, %v541, 2102212464
    %v554 = vsel %vm550, %v538, %v553
    %v555 = vsel %vm549, %v552, %v554
    %v556 = vsel %vm548, %v535, %v538
    %v557 = vsel %vm551, %v544, 920167782
    %v558 = vsel %vm550, %v541, %v557
    %v559 = vsel %vm549, %v556, %v558
    %v560 = vsel %vm548, %v538, %v541
    %v561 = vsel %vm551, %v547, 1326507024
    %v562 = vsel %vm550, %v544, %v561
    %v563 = vsel %vm549, %v560, %v562
    %v564 = vshll.u32 %v524, 8
    %v565 = vmul.u32.u64.compose %v564, %v563
    %v566 = vextract.low.u32 %v565
    %v567 = vextract.high.u32 %v565
    %v568 = vmul.u32.u64.compose %v564, %v559
    %v569 = vextract.low.u32 %v568
    %v570 = vextract.high.u32 %v568
    %v571 = vmul.u32 %v564, %v555
    %v572 = vadd.s32 %v567, %v569
    %vm573 = vc.u32 %v567, %v569
    %v574 = vadd.s32 %v570, 1
    %v575 = vsel %vm573, %v574, %v570
    %v576 = vadd.s32 %v571, %v575
    %v577 = vadd.s32 %v576, 536870912
    %v578 = vshrl.u32 %v577, 30
    %v579 = vshll.u32 %v578, 30
    %v580 = vsub.s32 %v576, %v579
    %vm581 = vcmp.lt.s32.totalorder %v580, 0
    %v582 = vsub.s32 0, %v580
    %v583 = vsel %vm581, %v582, %v580
    %v584 = vclz %v583
    %v585 = vsub.s32 %v584, 2
    %vm586 = vcmp.gt.s32.totalorder 0, %v585
    %v587 = vsel %vm586, 0, %v585
    %v588 = vsub.s32 32, %v587
    %v589 = vshll.u32 %v580, %v587
    %v590 = vshrl.u32 %v572, %v588
    %v591 = vor.u32 %v589, %v590
    %v592 = vsub.s32 4294967266, %v587
    %v593 = vadd.s32 %v592, 127
    %v594 = vshll.u32 %v593, 23
    %v595 = vor.u32 4788187, %v594
    %v596 = vand.u32 2147483647, %v595
    %v598 = vcvt.s32.f32 %v591
    %v599 = vmul.f32 %v598, %v596
    %v600 = vxor.u32 %v599, 2147483648
    %v601 = vsel %vm518, %v600, %v599
    %v602 = vsub.s32 4, %v578
    %v603 = vsel %vm518, %v602, %v578
    %v604 = vsel %vm517, %v402, %v601
    %v605 = vsel %vm517, 0, %v603
    %v606 = vcosq.f32.pop %v604
    %v607 = vsinq.f32.pop %v604
    %vm608 = vweird.f32 %v402
    %v609 = vand.u32 %v605, 3
    %vm610 = vcmp.lt.s32.totalorder %v609, 2
    %vm611 = vcmp.eq.s32.totalorder %v609, 0
    %v612 = vxor.u32 %v607, 2147483648
    %v613 = vsel %vm611, %v606, %v612
    %vm614 = vcmp.eq.s32.totalorder %v609, 2
    %v615 = vxor.u32 %v606, 2147483648
    %v616 = vsel %vm614, %v615, %v607
    %v617 = vsel %vm610, %v613, %v616
    %v618 = vsel %vm608, nan, %v617
    %v619 = vand.u32 2147483647, %v403
    %vm620 = vcmp.le.f32.partialorder %v619, 0.7853982
    %vm621 = vcmp.lt.s32.totalorder %v403, 0
    %v622 = vand.u32 %v403, 2139095040
    %v623 = vshrl.u32 %v622, 23
    %v624 = vsub.s32 %v623, 127
    %v625 = vand.u32 2147483647, %v403
    %v626 = vand.u32 %v625, 8388607
    %v627 = vor.u32 %v626, 8388608
    %v628 = vsub.s32 0, %v627
    %v629 = vadd.s32 %v624, 1
    %vm630 = vcmp.gt.s32.totalorder %v629, 0
    %v631 = vsel %vm630, %v629, 0
    %v632 = vshrl.u32 %v631, 5
    %v633 = vand.u32 %v631, 31
    %v634 = vsub.s32 32, %v633
    %v635 = vshrl.u32 683565275, %v634
    %v636 = vshll.u32 683565275, %v633
    %v637 = vshrl.u32 2475754826, %v634
    %v638 = vor.u32 %v636, %v637
    %v639 = vshll.u32 2475754826, %v633
    %v640 = vshrl.u32 2131351028, %v634
    %v641 = vor.u32 %v639, %v640
    %v642 = vshll.u32 2131351028, %v633
    %v643 = vshrl.u32 2102212464, %v634
    %v644 = vor.u32 %v642, %v643
    %v645 = vshll.u32 2102212464, %v633
    %v646 = vshrl.u32 920167782, %v634
    %v647 = vor.u32 %v645, %v646
    %v648 = vshll.u32 920167782, %v633
    %v649 = vshrl.u32 1326507024, %v634
    %v650 = vor.u32 %v648, %v649
    %vm651 = vcmp.lt.s32.totalorder %v632, 1
    %vm652 = vcmp.lt.s32.totalorder %v632, 2
    %vm653 = vcmp.lt.s32.totalorder %v632, 3
    %vm654 = vcmp.lt.s32.totalorder %v632, 4
    %v655 = vsel %vm651, %v635, %v638
    %v656 = vsel %vm654, %v644, 2102212464
    %v657 = vsel %vm653, %v641, %v656
    %v658 = vsel %vm652, %v655, %v657
    %v659 = vsel %vm651, %v638, %v641
    %v660 = vsel %vm654, %v647, 920167782
    %v661 = vsel %vm653, %v644, %v660
    %v662 = vsel %vm652, %v659, %v661
    %v663 = vsel %vm651, %v641, %v644
    %v664 = vsel %vm654, %v650, 1326507024
    %v665 = vsel %vm653, %v647, %v664
    %v666 = vsel %vm652, %v663, %v665
    %v667 = vshll.u32 %v627, 8
    %v668 = vmul.u32.u64.compose %v667, %v666
    %v669 = vextract.low.u32 %v668
    %v670 = vextract.high.u32 %v668
    %v671 = vmul.u32.u64.compose %v667, %v662
    %v672 = vextract.low.u32 %v671
    %v673 = vextract.high.u32 %v671
    %v674 = vmul.u32 %v667, %v658
    %v675 = vadd.s32 %v670, %v672
    %vm676 = vc.u32 %v670, %v672
    %v677 = vadd.s32 %v673, 1
    %v678 = vsel %vm676, %v677, %v673
    %v679 = vadd.s32 %v674, %v678
    %v680 = vadd.s32 %v679, 536870912
    %v681 = vshrl.u32 %v680, 30
    %v682 = vshll.u32 %v681, 30
    %v683 = vsub.s32 %v679, %v682
    %vm684 = vcmp.lt.s32.totalorder %v683, 0
    %v685 = vsub.s32 0, %v683
    %v686 = vsel %vm684, %v685, %v683
    %v687 = vclz %v686
    %v688 = vsub.s32 %v687, 2
    %vm689 = vcmp.gt.s32.totalorder 0, %v688
    %v690 = vsel %vm689, 0, %v688
    %v691 = vsub.s32 32, %v690
    %v692 = vshll.u32 %v683, %v690
    %v693 = vshrl.u32 %v675, %v691
    %v694 = vor.u32 %v692, %v693
    %v695 = vsub.s32 4294967266, %v690
    %v696 = vadd.s32 %v695, 127
    %v697 = vshll.u32 %v696, 23
    %v698 = vor.u32 4788187, %v697
    %v699 = vand.u32 2147483647, %v698
    %v701 = vcvt.s32.f32 %v694
    %v702 = vmul.f32 %v701, %v699
    %v703 = vxor.u32 %v702, 2147483648
    %v704 = vsel %vm621, %v703, %v702
    %v705 = vsub.s32 4, %v681
    %v706 = vsel %vm621, %v705, %v681
    %v707 = vsel %vm620, %v403, %v704
    %v708 = vsel %vm620, 0, %v706
    %v709 = vcosq.f32.pop %v707
    %v710 = vsinq.f32.pop %v707
    %vm711 = vweird.f32 %v403
    %v712 = vand.u32 %v708, 3
    %vm713 = vcmp.lt.s32.totalorder %v712, 2
    %vm714 = vcmp.eq.s32.totalorder %v712, 0
    %v715 = vxor.u32 %v710, 2147483648
    %v716 = vsel %vm714, %v709, %v715
    %vm717 = vcmp.eq.s32.totalorder %v712, 2
    %v718 = vxor.u32 %v709, 2147483648
    %v719 = vsel %vm717, %v718, %v710
    %v720 = vsel %vm713, %v716, %v719
    %v721 = vsel %vm711, nan, %v720
    %v722 = vand.u32 2147483647, %v404
    %vm723 = vcmp.le.f32.partialorder %v722, 0.7853982
    %vm724 = vcmp.lt.s32.totalorder %v404, 0
    %v725 = vand.u32 %v404, 2139095040
    %v726 = vshrl.u32 %v725, 23
    %v727 = vsub.s32 %v726, 127
    %v728 = vand.u32 2147483647, %v404
    %v729 = vand.u32 %v728, 8388607
    %v730 = vor.u32 %v729, 8388608
    %v731 = vsub.s32 0, %v730
    %v732 = vadd.s32 %v727, 1
    %vm733 = vcmp.gt.s32.totalorder %v732, 0
    %v734 = vsel %vm733, %v732, 0
    %v735 = vshrl.u32 %v734, 5
    %v736 = vand.u32 %v734, 31
    %v737 = vsub.s32 32, %v736
    %v738 = vshrl.u32 683565275, %v737
    %v739 = vshll.u32 683565275, %v736
    %v740 = vshrl.u32 2475754826, %v737
    %v741 = vor.u32 %v739, %v740
    %v742 = vshll.u32 2475754826, %v736
    %v743 = vshrl.u32 2131351028, %v737
    %v744 = vor.u32 %v742, %v743
    %v745 = vshll.u32 2131351028, %v736
    %v746 = vshrl.u32 2102212464, %v737
    %v747 = vor.u32 %v745, %v746
    %v748 = vshll.u32 2102212464, %v736
    %v749 = vshrl.u32 920167782, %v737
    %v750 = vor.u32 %v748, %v749
    %v751 = vshll.u32 920167782, %v736
    %v752 = vshrl.u32 1326507024, %v737
    %v753 = vor.u32 %v751, %v752
    %vm754 = vcmp.lt.s32.totalorder %v735, 1
    %vm755 = vcmp.lt.s32.totalorder %v735, 2
    %vm756 = vcmp.lt.s32.totalorder %v735, 3
    %vm757 = vcmp.lt.s32.totalorder %v735, 4
    %v758 = vsel %vm754, %v738, %v741
    %v759 = vsel %vm757, %v747, 2102212464
    %v760 = vsel %vm756, %v744, %v759
    %v761 = vsel %vm755, %v758, %v760
    %v762 = vsel %vm754, %v741, %v744
    %v763 = vsel %vm757, %v750, 920167782
    %v764 = vsel %vm756, %v747, %v763
    %v765 = vsel %vm755, %v762, %v764
    %v766 = vsel %vm754, %v744, %v747
    %v767 = vsel %vm757, %v753, 1326507024
    %v768 = vsel %vm756, %v750, %v767
    %v769 = vsel %vm755, %v766, %v768
    %v770 = vshll.u32 %v730, 8
    %v771 = vmul.u32.u64.compose %v770, %v769
    %v772 = vextract.low.u32 %v771
    %v773 = vextract.high.u32 %v771
    %v774 = vmul.u32.u64.compose %v770, %v765
    %v775 = vextract.low.u32 %v774
    %v776 = vextract.high.u32 %v774
    %v777 = vmul.u32 %v770, %v761
    %v778 = vadd.s32 %v773, %v775
    %vm779 = vc.u32 %v773, %v775
    %v780 = vadd.s32 %v776, 1
    %v781 = vsel %vm779, %v780, %v776
    %v782 = vadd.s32 %v777, %v781
    %v783 = vadd.s32 %v782, 536870912
    %v784 = vshrl.u32 %v783, 30
    %v785 = vshll.u32 %v784, 30
    %v786 = vsub.s32 %v782, %v785
    %vm787 = vcmp.lt.s32.totalorder %v786, 0
    %v788 = vsub.s32 0, %v786
    %v789 = vsel %vm787, %v788, %v786
    %v790 = vclz %v789
    %v791 = vsub.s32 %v790, 2
    %vm792 = vcmp.gt.s32.totalorder 0, %v791
    %v793 = vsel %vm792, 0, %v791
    %v794 = vsub.s32 32, %v793
    %v795 = vshll.u32 %v786, %v793
    %v796 = vshrl.u32 %v778, %v794
    %v797 = vor.u32 %v795, %v796
    %v798 = vsub.s32 4294967266, %v793
    %v799 = vadd.s32 %v798, 127
    %v800 = vshll.u32 %v799, 23
    %v801 = vor.u32 4788187, %v800
    %v802 = vand.u32 2147483647, %v801
    %v804 = vcvt.s32.f32 %v797
    %v805 = vmul.f32 %v804, %v802
    %v806 = vxor.u32 %v805, 2147483648
    %v807 = vsel %vm724, %v806, %v805
    %v808 = vsub.s32 4, %v784
    %v809 = vsel %vm724, %v808, %v784
    %v810 = vsel %vm723, %v404, %v807
    %v811 = vsel %vm723, 0, %v809
    %v812 = vcosq.f32.pop %v810
    %v813 = vsinq.f32.pop %v810
    %vm814 = vweird.f32 %v404
    %v815 = vand.u32 %v811, 3
    %vm816 = vcmp.lt.s32.totalorder %v815, 2
    %vm817 = vcmp.eq.s32.totalorder %v815, 0
    %v818 = vxor.u32 %v813, 2147483648
    %v819 = vsel %vm817, %v812, %v818
    %vm820 = vcmp.eq.s32.totalorder %v815, 2
    %v821 = vxor.u32 %v812, 2147483648
    %v822 = vsel %vm820, %v821, %v813
    %v823 = vsel %vm816, %v819, %v822
    %v824 = vsel %vm814, nan, %v823
    %v825 = vand.u32 2147483647, %v405
    %vm826 = vcmp.le.f32.partialorder %v825, 0.7853982
    %vm827 = vcmp.lt.s32.totalorder %v405, 0
    %v828 = vand.u32 %v405, 2139095040
    %v829 = vshrl.u32 %v828, 23
    %v830 = vsub.s32 %v829, 127
    %v831 = vand.u32 2147483647, %v405
    %v832 = vand.u32 %v831, 8388607
    %v833 = vor.u32 %v832, 8388608
    %v834 = vsub.s32 0, %v833
    %v835 = vadd.s32 %v830, 1
    %vm836 = vcmp.gt.s32.totalorder %v835, 0
    %v837 = vsel %vm836, %v835, 0
    %v838 = vshrl.u32 %v837, 5
    %v839 = vand.u32 %v837, 31
    %v840 = vsub.s32 32, %v839
    %v841 = vshrl.u32 683565275, %v840
    %v842 = vshll.u32 683565275, %v839
    %v843 = vshrl.u32 2475754826, %v840
    %v844 = vor.u32 %v842, %v843
    %v845 = vshll.u32 2475754826, %v839
    %v846 = vshrl.u32 2131351028, %v840
    %v847 = vor.u32 %v845, %v846
    %v848 = vshll.u32 2131351028, %v839
    %v849 = vshrl.u32 2102212464, %v840
    %v850 = vor.u32 %v848, %v849
    %v851 = vshll.u32 2102212464, %v839
    %v852 = vshrl.u32 920167782, %v840
    %v853 = vor.u32 %v851, %v852
    %v854 = vshll.u32 920167782, %v839
    %v855 = vshrl.u32 1326507024, %v840
    %v856 = vor.u32 %v854, %v855
    %vm857 = vcmp.lt.s32.totalorder %v838, 1
    %vm858 = vcmp.lt.s32.totalorder %v838, 2
    %vm859 = vcmp.lt.s32.totalorder %v838, 3
    %vm860 = vcmp.lt.s32.totalorder %v838, 4
    %v861 = vsel %vm857, %v841, %v844
    %v862 = vsel %vm860, %v850, 2102212464
    %v863 = vsel %vm859, %v847, %v862
    %v864 = vsel %vm858, %v861, %v863
    %v865 = vsel %vm857, %v844, %v847
    %v866 = vsel %vm860, %v853, 920167782
    %v867 = vsel %vm859, %v850, %v866
    %v868 = vsel %vm858, %v865, %v867
    %v869 = vsel %vm857, %v847, %v850
    %v870 = vsel %vm860, %v856, 1326507024
    %v871 = vsel %vm859, %v853, %v870
    %v872 = vsel %vm858, %v869, %v871
    %v873 = vshll.u32 %v833, 8
    %v874 = vmul.u32.u64.compose %v873, %v872
    %v875 = vextract.low.u32 %v874
    %v876 = vextract.high.u32 %v874
    %v877 = vmul.u32.u64.compose %v873, %v868
    %v878 = vextract.low.u32 %v877
    %v879 = vextract.high.u32 %v877
    %v880 = vmul.u32 %v873, %v864
    %v881 = vadd.s32 %v876, %v878
    %vm882 = vc.u32 %v876, %v878
    %v883 = vadd.s32 %v879, 1
    %v884 = vsel %vm882, %v883, %v879
    %v885 = vadd.s32 %v880, %v884
    %v886 = vadd.s32 %v885, 536870912
    %v887 = vshrl.u32 %v886, 30
    %v888 = vshll.u32 %v887, 30
    %v889 = vsub.s32 %v885, %v888
    %vm890 = vcmp.lt.s32.totalorder %v889, 0
    %v891 = vsub.s32 0, %v889
    %v892 = vsel %vm890, %v891, %v889
    %v893 = vclz %v892
    %v894 = vsub.s32 %v893, 2
    %vm895 = vcmp.gt.s32.totalorder 0, %v894
    %v896 = vsel %vm895, 0, %v894
    %v897 = vsub.s32 32, %v896
    %v898 = vshll.u32 %v889, %v896
    %v899 = vshrl.u32 %v881, %v897
    %v900 = vor.u32 %v898, %v899
    %v901 = vsub.s32 4294967266, %v896
    %v902 = vadd.s32 %v901, 127
    %v903 = vshll.u32 %v902, 23
    %v904 = vor.u32 4788187, %v903
    %v905 = vand.u32 2147483647, %v904
    %v907 = vcvt.s32.f32 %v900
    %v908 = vmul.f32 %v907, %v905
    %v909 = vxor.u32 %v908, 2147483648
    %v910 = vsel %vm827, %v909, %v908
    %v911 = vsub.s32 4, %v887
    %v912 = vsel %vm827, %v911, %v887
    %v913 = vsel %vm826, %v405, %v910
    %v914 = vsel %vm826, 0, %v912
    %v915 = vcosq.f32.pop %v913
    %v916 = vsinq.f32.pop %v913
    %vm917 = vweird.f32 %v405
    %v918 = vand.u32 %v914, 3
    %vm919 = vcmp.lt.s32.totalorder %v918, 2
    %vm920 = vcmp.eq.s32.totalorder %v918, 0
    %v921 = vxor.u32 %v916, 2147483648
    %v922 = vsel %vm920, %v915, %v921
    %vm923 = vcmp.eq.s32.totalorder %v918, 2
    %v924 = vxor.u32 %v915, 2147483648
    %v925 = vsel %vm923, %v924, %v916
    %v926 = vsel %vm919, %v922, %v925
    %v927 = vsel %vm917, nan, %v926
    %v928 = vand.u32 2147483647, %v406
    %vm929 = vcmp.le.f32.partialorder %v928, 0.7853982
    %vm930 = vcmp.lt.s32.totalorder %v406, 0
    %v931 = vand.u32 %v406, 2139095040
    %v932 = vshrl.u32 %v931, 23
    %v933 = vsub.s32 %v932, 127
    %v934 = vand.u32 2147483647, %v406
    %v935 = vand.u32 %v934, 8388607
    %v936 = vor.u32 %v935, 8388608
    %v937 = vsub.s32 0, %v936
    %v938 = vadd.s32 %v933, 1
    %vm939 = vcmp.gt.s32.totalorder %v938, 0
    %v940 = vsel %vm939, %v938, 0
    %v941 = vshrl.u32 %v940, 5
    %v942 = vand.u32 %v940, 31
    %v943 = vsub.s32 32, %v942
    %v944 = vshrl.u32 683565275, %v943
    %v945 = vshll.u32 683565275, %v942
    %v946 = vshrl.u32 2475754826, %v943
    %v947 = vor.u32 %v945, %v946
    %v948 = vshll.u32 2475754826, %v942
    %v949 = vshrl.u32 2131351028, %v943
    %v950 = vor.u32 %v948, %v949
    %v951 = vshll.u32 2131351028, %v942
    %v952 = vshrl.u32 2102212464, %v943
    %v953 = vor.u32 %v951, %v952
    %v954 = vshll.u32 2102212464, %v942
    %v955 = vshrl.u32 920167782, %v943
    %v956 = vor.u32 %v954, %v955
    %v957 = vshll.u32 920167782, %v942
    %v958 = vshrl.u32 1326507024, %v943
    %v959 = vor.u32 %v957, %v958
    %vm960 = vcmp.lt.s32.totalorder %v941, 1
    %vm961 = vcmp.lt.s32.totalorder %v941, 2
    %vm962 = vcmp.lt.s32.totalorder %v941, 3
    %vm963 = vcmp.lt.s32.totalorder %v941, 4
    %v964 = vsel %vm960, %v944, %v947
    %v965 = vsel %vm963, %v953, 2102212464
    %v966 = vsel %vm962, %v950, %v965
    %v967 = vsel %vm961, %v964, %v966
    %v968 = vsel %vm960, %v947, %v950
    %v969 = vsel %vm963, %v956, 920167782
    %v970 = vsel %vm962, %v953, %v969
    %v971 = vsel %vm961, %v968, %v970
    %v972 = vsel %vm960, %v950, %v953
    %v973 = vsel %vm963, %v959, 1326507024
    %v974 = vsel %vm962, %v956, %v973
    %v975 = vsel %vm961, %v972, %v974
    %v976 = vshll.u32 %v936, 8
    %v977 = vmul.u32.u64.compose %v976, %v975
    %v978 = vextract.low.u32 %v977
    %v979 = vextract.high.u32 %v977
    %v980 = vmul.u32.u64.compose %v976, %v971
    %v981 = vextract.low.u32 %v980
    %v982 = vextract.high.u32 %v980
    %v983 = vmul.u32 %v976, %v967
    %v984 = vadd.s32 %v979, %v981
    %vm985 = vc.u32 %v979, %v981
    %v986 = vadd.s32 %v982, 1
    %v987 = vsel %vm985, %v986, %v982
    %v988 = vadd.s32 %v983, %v987
    %v989 = vadd.s32 %v988, 536870912
    %v990 = vshrl.u32 %v989, 30
    %v991 = vshll.u32 %v990, 30
    %v992 = vsub.s32 %v988, %v991
    %vm993 = vcmp.lt.s32.totalorder %v992, 0
    %v994 = vsub.s32 0, %v992
    %v995 = vsel %vm993, %v994, %v992
    %v996 = vclz %v995
    %v997 = vsub.s32 %v996, 2
    %vm998 = vcmp.gt.s32.totalorder 0, %v997
    %v999 = vsel %vm998, 0, %v997
    %v1000 = vsub.s32 32, %v999
    %v1001 = vshll.u32 %v992, %v999
    %v1002 = vshrl.u32 %v984, %v1000
    %v1003 = vor.u32 %v1001, %v1002
    %v1004 = vsub.s32 4294967266, %v999
    %v1005 = vadd.s32 %v1004, 127
    %v1006 = vshll.u32 %v1005, 23
    %v1007 = vor.u32 4788187, %v1006
    %v1008 = vand.u32 2147483647, %v1007
    %v1010 = vcvt.s32.f32 %v1003
    %v1011 = vmul.f32 %v1010, %v1008
    %v1012 = vxor.u32 %v1011, 2147483648
    %v1013 = vsel %vm930, %v1012, %v1011
    %v1014 = vsub.s32 4, %v990
    %v1015 = vsel %vm930, %v1014, %v990
    %v1016 = vsel %vm929, %v406, %v1013
    %v1017 = vsel %vm929, 0, %v1015
    %v1018 = vcosq.f32.pop %v1016
    %v1019 = vsinq.f32.pop %v1016
    %vm1020 = vweird.f32 %v406
    %v1021 = vand.u32 %v1017, 3
    %vm1022 = vcmp.lt.s32.totalorder %v1021, 2
    %vm1023 = vcmp.eq.s32.totalorder %v1021, 0
    %v1024 = vxor.u32 %v1019, 2147483648
    %v1025 = vsel %vm1023, %v1018, %v1024
    %vm1026 = vcmp.eq.s32.totalorder %v1021, 2
    %v1027 = vxor.u32 %v1018, 2147483648
    %v1028 = vsel %vm1026, %v1027, %v1019
    %v1029 = vsel %vm1022, %v1025, %v1028
    %v1030 = vsel %vm1020, nan, %v1029
    %v1031 = vand.u32 2147483647, %v407
    %vm1032 = vcmp.le.f32.partialorder %v1031, 0.7853982
    %vm1033 = vcmp.lt.s32.totalorder %v407, 0
    %v1034 = vand.u32 %v407, 2139095040
    %v1035 = vshrl.u32 %v1034, 23
    %v1036 = vsub.s32 %v1035, 127
    %v1037 = vand.u32 2147483647, %v407
    %v1038 = vand.u32 %v1037, 8388607
    %v1039 = vor.u32 %v1038, 8388608
    %v1040 = vsub.s32 0, %v1039
    %v1041 = vadd.s32 %v1036, 1
    %vm1042 = vcmp.gt.s32.totalorder %v1041, 0
    %v1043 = vsel %vm1042, %v1041, 0
    %v1044 = vshrl.u32 %v1043, 5
    %v1045 = vand.u32 %v1043, 31
    %v1046 = vsub.s32 32, %v1045
    %v1047 = vshrl.u32 683565275, %v1046
    %v1048 = vshll.u32 683565275, %v1045
    %v1049 = vshrl.u32 2475754826, %v1046
    %v1050 = vor.u32 %v1048, %v1049
    %v1051 = vshll.u32 2475754826, %v1045
    %v1052 = vshrl.u32 2131351028, %v1046
    %v1053 = vor.u32 %v1051, %v1052
    %v1054 = vshll.u32 2131351028, %v1045
    %v1055 = vshrl.u32 2102212464, %v1046
    %v1056 = vor.u32 %v1054, %v1055
    %v1057 = vshll.u32 2102212464, %v1045
    %v1058 = vshrl.u32 920167782, %v1046
    %v1059 = vor.u32 %v1057, %v1058
    %v1060 = vshll.u32 920167782, %v1045
    %v1061 = vshrl.u32 1326507024, %v1046
    %v1062 = vor.u32 %v1060, %v1061
    %vm1063 = vcmp.lt.s32.totalorder %v1044, 1
    %vm1064 = vcmp.lt.s32.totalorder %v1044, 2
    %vm1065 = vcmp.lt.s32.totalorder %v1044, 3
    %vm1066 = vcmp.lt.s32.totalorder %v1044, 4
    %v1067 = vsel %vm1063, %v1047, %v1050
    %v1068 = vsel %vm1066, %v1056, 2102212464
    %v1069 = vsel %vm1065, %v1053, %v1068
    %v1070 = vsel %vm1064, %v1067, %v1069
    %v1071 = vsel %vm1063, %v1050, %v1053
    %v1072 = vsel %vm1066, %v1059, 920167782
    %v1073 = vsel %vm1065, %v1056, %v1072
    %v1074 = vsel %vm1064, %v1071, %v1073
    %v1075 = vsel %vm1063, %v1053, %v1056
    %v1076 = vsel %vm1066, %v1062, 1326507024
    %v1077 = vsel %vm1065, %v1059, %v1076
    %v1078 = vsel %vm1064, %v1075, %v1077
    %v1079 = vshll.u32 %v1039, 8
    %v1080 = vmul.u32.u64.compose %v1079, %v1078
    %v1081 = vextract.low.u32 %v1080
    %v1082 = vextract.high.u32 %v1080
    %v1083 = vmul.u32.u64.compose %v1079, %v1074
    %v1084 = vextract.low.u32 %v1083
    %v1085 = vextract.high.u32 %v1083
    %v1086 = vmul.u32 %v1079, %v1070
    %v1087 = vadd.s32 %v1082, %v1084
    %vm1088 = vc.u32 %v1082, %v1084
    %v1089 = vadd.s32 %v1085, 1
    %v1090 = vsel %vm1088, %v1089, %v1085
    %v1091 = vadd.s32 %v1086, %v1090
    %v1092 = vadd.s32 %v1091, 536870912
    %v1093 = vshrl.u32 %v1092, 30
    %v1094 = vshll.u32 %v1093, 30
    %v1095 = vsub.s32 %v1091, %v1094
    %vm1096 = vcmp.lt.s32.totalorder %v1095, 0
    %v1097 = vsub.s32 0, %v1095
    %v1098 = vsel %vm1096, %v1097, %v1095
    %v1099 = vclz %v1098
    %v1100 = vsub.s32 %v1099, 2
    %vm1101 = vcmp.gt.s32.totalorder 0, %v1100
    %v1102 = vsel %vm1101, 0, %v1100
    %v1103 = vsub.s32 32, %v1102
    %v1104 = vshll.u32 %v1095, %v1102
    %v1105 = vshrl.u32 %v1087, %v1103
    %v1106 = vor.u32 %v1104, %v1105
    %v1107 = vsub.s32 4294967266, %v1102
    %v1108 = vadd.s32 %v1107, 127
    %v1109 = vshll.u32 %v1108, 23
    %v1110 = vor.u32 4788187, %v1109
    %v1111 = vand.u32 2147483647, %v1110
    %v1113 = vcvt.s32.f32 %v1106
    %v1114 = vmul.f32 %v1113, %v1111
    %v1115 = vxor.u32 %v1114, 2147483648
    %v1116 = vsel %vm1033, %v1115, %v1114
    %v1117 = vsub.s32 4, %v1093
    %v1118 = vsel %vm1033, %v1117, %v1093
    %v1119 = vsel %vm1032, %v407, %v1116
    %v1120 = vsel %vm1032, 0, %v1118
    %v1121 = vcosq.f32.pop %v1119
    %v1122 = vsinq.f32.pop %v1119
    %vm1123 = vweird.f32 %v407
    %v1124 = vand.u32 %v1120, 3
    %vm1125 = vcmp.lt.s32.totalorder %v1124, 2
    %vm1126 = vcmp.eq.s32.totalorder %v1124, 0
    %v1127 = vxor.u32 %v1122, 2147483648
    %v1128 = vsel %vm1126, %v1121, %v1127
    %vm1129 = vcmp.eq.s32.totalorder %v1124, 2
    %v1130 = vxor.u32 %v1121, 2147483648
    %v1131 = vsel %vm1129, %v1130, %v1122
    %v1132 = vsel %vm1125, %v1128, %v1131
    %v1133 = vsel %vm1123, nan, %v1132
    %v1134 = vand.u32 2147483647, %v408
    %vm1135 = vcmp.le.f32.partialorder %v1134, 0.7853982
    %vm1136 = vcmp.lt.s32.totalorder %v408, 0
    %v1137 = vand.u32 %v408, 2139095040
    %v1138 = vshrl.u32 %v1137, 23
    %v1139 = vsub.s32 %v1138, 127
    %v1140 = vand.u32 2147483647, %v408
    %v1141 = vand.u32 %v1140, 8388607
    %v1142 = vor.u32 %v1141, 8388608
    %v1143 = vsub.s32 0, %v1142
    %v1144 = vadd.s32 %v1139, 1
    %vm1145 = vcmp.gt.s32.totalorder %v1144, 0
    %v1146 = vsel %vm1145, %v1144, 0
    %v1147 = vshrl.u32 %v1146, 5
    %v1148 = vand.u32 %v1146, 31
    %v1149 = vsub.s32 32, %v1148
    %v1150 = vshrl.u32 683565275, %v1149
    %v1151 = vshll.u32 683565275, %v1148
    %v1152 = vshrl.u32 2475754826, %v1149
    %v1153 = vor.u32 %v1151, %v1152
    %v1154 = vshll.u32 2475754826, %v1148
    %v1155 = vshrl.u32 2131351028, %v1149
    %v1156 = vor.u32 %v1154, %v1155
    %v1157 = vshll.u32 2131351028, %v1148
    %v1158 = vshrl.u32 2102212464, %v1149
    %v1159 = vor.u32 %v1157, %v1158
    %v1160 = vshll.u32 2102212464, %v1148
    %v1161 = vshrl.u32 920167782, %v1149
    %v1162 = vor.u32 %v1160, %v1161
    %v1163 = vshll.u32 920167782, %v1148
    %v1164 = vshrl.u32 1326507024, %v1149
    %v1165 = vor.u32 %v1163, %v1164
    %vm1166 = vcmp.lt.s32.totalorder %v1147, 1
    %vm1167 = vcmp.lt.s32.totalorder %v1147, 2
    %vm1168 = vcmp.lt.s32.totalorder %v1147, 3
    %vm1169 = vcmp.lt.s32.totalorder %v1147, 4
    %v1170 = vsel %vm1166, %v1150, %v1153
    %v1171 = vsel %vm1169, %v1159, 2102212464
    %v1172 = vsel %vm1168, %v1156, %v1171
    %v1173 = vsel %vm1167, %v1170, %v1172
    %v1174 = vsel %vm1166, %v1153, %v1156
    %v1175 = vsel %vm1169, %v1162, 920167782
    %v1176 = vsel %vm1168, %v1159, %v1175
    %v1177 = vsel %vm1167, %v1174, %v1176
    %v1178 = vsel %vm1166, %v1156, %v1159
    %v1179 = vsel %vm1169, %v1165, 1326507024
    %v1180 = vsel %vm1168, %v1162, %v1179
    %v1181 = vsel %vm1167, %v1178, %v1180
    %v1182 = vshll.u32 %v1142, 8
    %v1183 = vmul.u32.u64.compose %v1182, %v1181
    %v1184 = vextract.low.u32 %v1183
    %v1185 = vextract.high.u32 %v1183
    %v1186 = vmul.u32.u64.compose %v1182, %v1177
    %v1187 = vextract.low.u32 %v1186
    %v1188 = vextract.high.u32 %v1186
    %v1189 = vmul.u32 %v1182, %v1173
    %v1190 = vadd.s32 %v1185, %v1187
    %vm1191 = vc.u32 %v1185, %v1187
    %v1192 = vadd.s32 %v1188, 1
    %v1193 = vsel %vm1191, %v1192, %v1188
    %v1194 = vadd.s32 %v1189, %v1193
    %v1195 = vadd.s32 %v1194, 536870912
    %v1196 = vshrl.u32 %v1195, 30
    %v1197 = vshll.u32 %v1196, 30
    %v1198 = vsub.s32 %v1194, %v1197
    %vm1199 = vcmp.lt.s32.totalorder %v1198, 0
    %v1200 = vsub.s32 0, %v1198
    %v1201 = vsel %vm1199, %v1200, %v1198
    %v1202 = vclz %v1201
    %v1203 = vsub.s32 %v1202, 2
    %vm1204 = vcmp.gt.s32.totalorder 0, %v1203
    %v1205 = vsel %vm1204, 0, %v1203
    %v1206 = vsub.s32 32, %v1205
    %v1207 = vshll.u32 %v1198, %v1205
    %v1208 = vshrl.u32 %v1190, %v1206
    %v1209 = vor.u32 %v1207, %v1208
    %v1210 = vsub.s32 4294967266, %v1205
    %v1211 = vadd.s32 %v1210, 127
    %v1212 = vshll.u32 %v1211, 23
    %v1213 = vor.u32 4788187, %v1212
    %v1214 = vand.u32 2147483647, %v1213
    %v1216 = vcvt.s32.f32 %v1209
    %v1217 = vmul.f32 %v1216, %v1214
    %v1218 = vxor.u32 %v1217, 2147483648
    %v1219 = vsel %vm1136, %v1218, %v1217
    %v1220 = vsub.s32 4, %v1196
    %v1221 = vsel %vm1136, %v1220, %v1196
    %v1222 = vsel %vm1135, %v408, %v1219
    %v1223 = vsel %vm1135, 0, %v1221
    %v1224 = vcosq.f32.pop %v1222
    %v1225 = vsinq.f32.pop %v1222
    %vm1226 = vweird.f32 %v408
    %v1227 = vand.u32 %v1223, 3
    %vm1228 = vcmp.lt.s32.totalorder %v1227, 2
    %vm1229 = vcmp.eq.s32.totalorder %v1227, 0
    %v1230 = vxor.u32 %v1225, 2147483648
    %v1231 = vsel %vm1229, %v1224, %v1230
    %vm1232 = vcmp.eq.s32.totalorder %v1227, 2
    %v1233 = vxor.u32 %v1224, 2147483648
    %v1234 = vsel %vm1232, %v1233, %v1225
    %v1235 = vsel %vm1228, %v1231, %v1234
    %v1236 = vsel %vm1226, nan, %v1235
    %v1237 = vand.u32 2147483647, %v409
    %vm1238 = vcmp.le.f32.partialorder %v1237, 0.7853982
    %vm1239 = vcmp.lt.s32.totalorder %v409, 0
    %v1240 = vand.u32 %v409, 2139095040
    %v1241 = vshrl.u32 %v1240, 23
    %v1242 = vsub.s32 %v1241, 127
    %v1243 = vand.u32 2147483647, %v409
    %v1244 = vand.u32 %v1243, 8388607
    %v1245 = vor.u32 %v1244, 8388608
    %v1246 = vsub.s32 0, %v1245
    %v1247 = vadd.s32 %v1242, 1
    %vm1248 = vcmp.gt.s32.totalorder %v1247, 0
    %v1249 = vsel %vm1248, %v1247, 0
    %v1250 = vshrl.u32 %v1249, 5
    %v1251 = vand.u32 %v1249, 31
    %v1252 = vsub.s32 32, %v1251
    %v1253 = vshrl.u32 683565275, %v1252
    %v1254 = vshll.u32 683565275, %v1251
    %v1255 = vshrl.u32 2475754826, %v1252
    %v1256 = vor.u32 %v1254, %v1255
    %v1257 = vshll.u32 2475754826, %v1251
    %v1258 = vshrl.u32 2131351028, %v1252
    %v1259 = vor.u32 %v1257, %v1258
    %v1260 = vshll.u32 2131351028, %v1251
    %v1261 = vshrl.u32 2102212464, %v1252
    %v1262 = vor.u32 %v1260, %v1261
    %v1263 = vshll.u32 2102212464, %v1251
    %v1264 = vshrl.u32 920167782, %v1252
    %v1265 = vor.u32 %v1263, %v1264
    %v1266 = vshll.u32 920167782, %v1251
    %v1267 = vshrl.u32 1326507024, %v1252
    %v1268 = vor.u32 %v1266, %v1267
    %vm1269 = vcmp.lt.s32.totalorder %v1250, 1
    %vm1270 = vcmp.lt.s32.totalorder %v1250, 2
    %vm1271 = vcmp.lt.s32.totalorder %v1250, 3
    %vm1272 = vcmp.lt.s32.totalorder %v1250, 4
    %v1273 = vsel %vm1269, %v1253, %v1256
    %v1274 = vsel %vm1272, %v1262, 2102212464
    %v1275 = vsel %vm1271, %v1259, %v1274
    %v1276 = vsel %vm1270, %v1273, %v1275
    %v1277 = vsel %vm1269, %v1256, %v1259
    %v1278 = vsel %vm1272, %v1265, 920167782
    %v1279 = vsel %vm1271, %v1262, %v1278
    %v1280 = vsel %vm1270, %v1277, %v1279
    %v1281 = vsel %vm1269, %v1259, %v1262
    %v1282 = vsel %vm1272, %v1268, 1326507024
    %v1283 = vsel %vm1271, %v1265, %v1282
    %v1284 = vsel %vm1270, %v1281, %v1283
    %v1285 = vshll.u32 %v1245, 8
    %v1286 = vmul.u32.u64.compose %v1285, %v1284
    %v1287 = vextract.low.u32 %v1286
    %v1288 = vextract.high.u32 %v1286
    %v1289 = vmul.u32.u64.compose %v1285, %v1280
    %v1290 = vextract.low.u32 %v1289
    %v1291 = vextract.high.u32 %v1289
    %v1292 = vmul.u32 %v1285, %v1276
    %v1293 = vadd.s32 %v1288, %v1290
    %vm1294 = vc.u32 %v1288, %v1290
    %v1295 = vadd.s32 %v1291, 1
    %v1296 = vsel %vm1294, %v1295, %v1291
    %v1297 = vadd.s32 %v1292, %v1296
    %v1298 = vadd.s32 %v1297, 536870912
    %v1299 = vshrl.u32 %v1298, 30
    %v1300 = vshll.u32 %v1299, 30
    %v1301 = vsub.s32 %v1297, %v1300
    %vm1302 = vcmp.lt.s32.totalorder %v1301, 0
    %v1303 = vsub.s32 0, %v1301
    %v1304 = vsel %vm1302, %v1303, %v1301
    %v1305 = vclz %v1304
    %v1306 = vsub.s32 %v1305, 2
    %vm1307 = vcmp.gt.s32.totalorder 0, %v1306
    %v1308 = vsel %vm1307, 0, %v1306
    %v1309 = vsub.s32 32, %v1308
    %v1310 = vshll.u32 %v1301, %v1308
    %v1311 = vshrl.u32 %v1293, %v1309
    %v1312 = vor.u32 %v1310, %v1311
    %v1313 = vsub.s32 4294967266, %v1308
    %v1314 = vadd.s32 %v1313, 127
    %v1315 = vshll.u32 %v1314, 23
    %v1316 = vor.u32 4788187, %v1315
    %v1317 = vand.u32 2147483647, %v1316
    %v1319 = vcvt.s32.f32 %v1312
    %v1320 = vmul.f32 %v1319, %v1317
    %v1321 = vxor.u32 %v1320, 2147483648
    %v1322 = vsel %vm1239, %v1321, %v1320
    %v1323 = vsub.s32 4, %v1299
    %v1324 = vsel %vm1239, %v1323, %v1299
    %v1325 = vsel %vm1238, %v409, %v1322
    %v1326 = vsel %vm1238, 0, %v1324
    %v1327 = vcosq.f32.pop %v1325
    %v1328 = vsinq.f32.pop %v1325
    %vm1329 = vweird.f32 %v409
    %v1330 = vand.u32 %v1326, 3
    %vm1331 = vcmp.lt.s32.totalorder %v1330, 2
    %vm1332 = vcmp.eq.s32.totalorder %v1330, 0
    %v1333 = vxor.u32 %v1328, 2147483648
    %v1334 = vsel %vm1332, %v1327, %v1333
    %vm1335 = vcmp.eq.s32.totalorder %v1330, 2
    %v1336 = vxor.u32 %v1327, 2147483648
    %v1337 = vsel %vm1335, %v1336, %v1328
    %v1338 = vsel %vm1331, %v1334, %v1337
    %v1339 = vsel %vm1329, nan, %v1338
    %v1340 = vand.u32 2147483647, %v410
    %vm1341 = vcmp.le.f32.partialorder %v1340, 0.7853982
    %vm1342 = vcmp.lt.s32.totalorder %v410, 0
    %v1343 = vand.u32 %v410, 2139095040
    %v1344 = vshrl.u32 %v1343, 23
    %v1345 = vsub.s32 %v1344, 127
    %v1346 = vand.u32 2147483647, %v410
    %v1347 = vand.u32 %v1346, 8388607
    %v1348 = vor.u32 %v1347, 8388608
    %v1349 = vsub.s32 0, %v1348
    %v1350 = vadd.s32 %v1345, 1
    %vm1351 = vcmp.gt.s32.totalorder %v1350, 0
    %v1352 = vsel %vm1351, %v1350, 0
    %v1353 = vshrl.u32 %v1352, 5
    %v1354 = vand.u32 %v1352, 31
    %v1355 = vsub.s32 32, %v1354
    %v1356 = vshrl.u32 683565275, %v1355
    %v1357 = vshll.u32 683565275, %v1354
    %v1358 = vshrl.u32 2475754826, %v1355
    %v1359 = vor.u32 %v1357, %v1358
    %v1360 = vshll.u32 2475754826, %v1354
    %v1361 = vshrl.u32 2131351028, %v1355
    %v1362 = vor.u32 %v1360, %v1361
    %v1363 = vshll.u32 2131351028, %v1354
    %v1364 = vshrl.u32 2102212464, %v1355
    %v1365 = vor.u32 %v1363, %v1364
    %v1366 = vshll.u32 2102212464, %v1354
    %v1367 = vshrl.u32 920167782, %v1355
    %v1368 = vor.u32 %v1366, %v1367
    %v1369 = vshll.u32 920167782, %v1354
    %v1370 = vshrl.u32 1326507024, %v1355
    %v1371 = vor.u32 %v1369, %v1370
    %vm1372 = vcmp.lt.s32.totalorder %v1353, 1
    %vm1373 = vcmp.lt.s32.totalorder %v1353, 2
    %vm1374 = vcmp.lt.s32.totalorder %v1353, 3
    %vm1375 = vcmp.lt.s32.totalorder %v1353, 4
    %v1376 = vsel %vm1372, %v1356, %v1359
    %v1377 = vsel %vm1375, %v1365, 2102212464
    %v1378 = vsel %vm1374, %v1362, %v1377
    %v1379 = vsel %vm1373, %v1376, %v1378
    %v1380 = vsel %vm1372, %v1359, %v1362
    %v1381 = vsel %vm1375, %v1368, 920167782
    %v1382 = vsel %vm1374, %v1365, %v1381
    %v1383 = vsel %vm1373, %v1380, %v1382
    %v1384 = vsel %vm1372, %v1362, %v1365
    %v1385 = vsel %vm1375, %v1371, 1326507024
    %v1386 = vsel %vm1374, %v1368, %v1385
    %v1387 = vsel %vm1373, %v1384, %v1386
    %v1388 = vshll.u32 %v1348, 8
    %v1389 = vmul.u32.u64.compose %v1388, %v1387
    %v1390 = vextract.low.u32 %v1389
    %v1391 = vextract.high.u32 %v1389
    %v1392 = vmul.u32.u64.compose %v1388, %v1383
    %v1393 = vextract.low.u32 %v1392
    %v1394 = vextract.high.u32 %v1392
    %v1395 = vmul.u32 %v1388, %v1379
    %v1396 = vadd.s32 %v1391, %v1393
    %vm1397 = vc.u32 %v1391, %v1393
    %v1398 = vadd.s32 %v1394, 1
    %v1399 = vsel %vm1397, %v1398, %v1394
    %v1400 = vadd.s32 %v1395, %v1399
    %v1401 = vadd.s32 %v1400, 536870912
    %v1402 = vshrl.u32 %v1401, 30
    %v1403 = vshll.u32 %v1402, 30
    %v1404 = vsub.s32 %v1400, %v1403
    %vm1405 = vcmp.lt.s32.totalorder %v1404, 0
    %v1406 = vsub.s32 0, %v1404
    %v1407 = vsel %vm1405, %v1406, %v1404
    %v1408 = vclz %v1407
    %v1409 = vsub.s32 %v1408, 2
    %vm1410 = vcmp.gt.s32.totalorder 0, %v1409
    %v1411 = vsel %vm1410, 0, %v1409
    %v1412 = vsub.s32 32, %v1411
    %v1413 = vshll.u32 %v1404, %v1411
    %v1414 = vshrl.u32 %v1396, %v1412
    %v1415 = vor.u32 %v1413, %v1414
    %v1416 = vsub.s32 4294967266, %v1411
    %v1417 = vadd.s32 %v1416, 127
    %v1418 = vshll.u32 %v1417, 23
    %v1419 = vor.u32 4788187, %v1418
    %v1420 = vand.u32 2147483647, %v1419
    %v1422 = vcvt.s32.f32 %v1415
    %v1423 = vmul.f32 %v1422, %v1420
    %v1424 = vxor.u32 %v1423, 2147483648
    %v1425 = vsel %vm1342, %v1424, %v1423
    %v1426 = vsub.s32 4, %v1402
    %v1427 = vsel %vm1342, %v1426, %v1402
    %v1428 = vsel %vm1341, %v410, %v1425
    %v1429 = vsel %vm1341, 0, %v1427
    %v1430 = vcosq.f32.pop %v1428
    %v1431 = vsinq.f32.pop %v1428
    %vm1432 = vweird.f32 %v410
    %v1433 = vand.u32 %v1429, 3
    %vm1434 = vcmp.lt.s32.totalorder %v1433, 2
    %vm1435 = vcmp.eq.s32.totalorder %v1433, 0
    %v1436 = vxor.u32 %v1431, 2147483648
    %v1437 = vsel %vm1435, %v1430, %v1436
    %vm1438 = vcmp.eq.s32.totalorder %v1433, 2
    %v1439 = vxor.u32 %v1430, 2147483648
    %v1440 = vsel %vm1438, %v1439, %v1431
    %v1441 = vsel %vm1434, %v1437, %v1440
    %v1442 = vsel %vm1432, nan, %v1441
    %v1443 = vand.u32 2147483647, %v411
    %vm1444 = vcmp.le.f32.partialorder %v1443, 0.7853982
    %vm1445 = vcmp.lt.s32.totalorder %v411, 0
    %v1446 = vand.u32 %v411, 2139095040
    %v1447 = vshrl.u32 %v1446, 23
    %v1448 = vsub.s32 %v1447, 127
    %v1449 = vand.u32 2147483647, %v411
    %v1450 = vand.u32 %v1449, 8388607
    %v1451 = vor.u32 %v1450, 8388608
    %v1452 = vsub.s32 0, %v1451
    %v1453 = vadd.s32 %v1448, 1
    %vm1454 = vcmp.gt.s32.totalorder %v1453, 0
    %v1455 = vsel %vm1454, %v1453, 0
    %v1456 = vshrl.u32 %v1455, 5
    %v1457 = vand.u32 %v1455, 31
    %v1458 = vsub.s32 32, %v1457
    %v1459 = vshrl.u32 683565275, %v1458
    %v1460 = vshll.u32 683565275, %v1457
    %v1461 = vshrl.u32 2475754826, %v1458
    %v1462 = vor.u32 %v1460, %v1461
    %v1463 = vshll.u32 2475754826, %v1457
    %v1464 = vshrl.u32 2131351028, %v1458
    %v1465 = vor.u32 %v1463, %v1464
    %v1466 = vshll.u32 2131351028, %v1457
    %v1467 = vshrl.u32 2102212464, %v1458
    %v1468 = vor.u32 %v1466, %v1467
    %v1469 = vshll.u32 2102212464, %v1457
    %v1470 = vshrl.u32 920167782, %v1458
    %v1471 = vor.u32 %v1469, %v1470
    %v1472 = vshll.u32 920167782, %v1457
    %v1473 = vshrl.u32 1326507024, %v1458
    %v1474 = vor.u32 %v1472, %v1473
    %vm1475 = vcmp.lt.s32.totalorder %v1456, 1
    %vm1476 = vcmp.lt.s32.totalorder %v1456, 2
    %vm1477 = vcmp.lt.s32.totalorder %v1456, 3
    %vm1478 = vcmp.lt.s32.totalorder %v1456, 4
    %v1479 = vsel %vm1475, %v1459, %v1462
    %v1480 = vsel %vm1478, %v1468, 2102212464
    %v1481 = vsel %vm1477, %v1465, %v1480
    %v1482 = vsel %vm1476, %v1479, %v1481
    %v1483 = vsel %vm1475, %v1462, %v1465
    %v1484 = vsel %vm1478, %v1471, 920167782
    %v1485 = vsel %vm1477, %v1468, %v1484
    %v1486 = vsel %vm1476, %v1483, %v1485
    %v1487 = vsel %vm1475, %v1465, %v1468
    %v1488 = vsel %vm1478, %v1474, 1326507024
    %v1489 = vsel %vm1477, %v1471, %v1488
    %v1490 = vsel %vm1476, %v1487, %v1489
    %v1491 = vshll.u32 %v1451, 8
    %v1492 = vmul.u32.u64.compose %v1491, %v1490
    %v1493 = vextract.low.u32 %v1492
    %v1494 = vextract.high.u32 %v1492
    %v1495 = vmul.u32.u64.compose %v1491, %v1486
    %v1496 = vextract.low.u32 %v1495
    %v1497 = vextract.high.u32 %v1495
    %v1498 = vmul.u32 %v1491, %v1482
    %v1499 = vadd.s32 %v1494, %v1496
    %vm1500 = vc.u32 %v1494, %v1496
    %v1501 = vadd.s32 %v1497, 1
    %v1502 = vsel %vm1500, %v1501, %v1497
    %v1503 = vadd.s32 %v1498, %v1502
    %v1504 = vadd.s32 %v1503, 536870912
    %v1505 = vshrl.u32 %v1504, 30
    %v1506 = vshll.u32 %v1505, 30
    %v1507 = vsub.s32 %v1503, %v1506
    %vm1508 = vcmp.lt.s32.totalorder %v1507, 0
    %v1509 = vsub.s32 0, %v1507
    %v1510 = vsel %vm1508, %v1509, %v1507
    %v1511 = vclz %v1510
    %v1512 = vsub.s32 %v1511, 2
    %vm1513 = vcmp.gt.s32.totalorder 0, %v1512
    %v1514 = vsel %vm1513, 0, %v1512
    %v1515 = vsub.s32 32, %v1514
    %v1516 = vshll.u32 %v1507, %v1514
    %v1517 = vshrl.u32 %v1499, %v1515
    %v1518 = vor.u32 %v1516, %v1517
    %v1519 = vsub.s32 4294967266, %v1514
    %v1520 = vadd.s32 %v1519, 127
    %v1521 = vshll.u32 %v1520, 23
    %v1522 = vor.u32 4788187, %v1521
    %v1523 = vand.u32 2147483647, %v1522
    %v1525 = vcvt.s32.f32 %v1518
    %v1526 = vmul.f32 %v1525, %v1523
    %v1527 = vxor.u32 %v1526, 2147483648
    %v1528 = vsel %vm1445, %v1527, %v1526
    %v1529 = vsub.s32 4, %v1505
    %v1530 = vsel %vm1445, %v1529, %v1505
    %v1531 = vsel %vm1444, %v411, %v1528
    %v1532 = vsel %vm1444, 0, %v1530
    %v1533 = vcosq.f32.pop %v1531
    %v1534 = vsinq.f32.pop %v1531
    %vm1535 = vweird.f32 %v411
    %v1536 = vand.u32 %v1532, 3
    %vm1537 = vcmp.lt.s32.totalorder %v1536, 2
    %vm1538 = vcmp.eq.s32.totalorder %v1536, 0
    %v1539 = vxor.u32 %v1534, 2147483648
    %v1540 = vsel %vm1538, %v1533, %v1539
    %vm1541 = vcmp.eq.s32.totalorder %v1536, 2
    %v1542 = vxor.u32 %v1533, 2147483648
    %v1543 = vsel %vm1541, %v1542, %v1534
    %v1544 = vsel %vm1537, %v1540, %v1543
    %v1545 = vsel %vm1535, nan, %v1544
    %v1546 = vand.u32 2147483647, %v412
    %vm1547 = vcmp.le.f32.partialorder %v1546, 0.7853982
    %vm1548 = vcmp.lt.s32.totalorder %v412, 0
    %v1549 = vand.u32 %v412, 2139095040
    %v1550 = vshrl.u32 %v1549, 23
    %v1551 = vsub.s32 %v1550, 127
    %v1552 = vand.u32 2147483647, %v412
    %v1553 = vand.u32 %v1552, 8388607
    %v1554 = vor.u32 %v1553, 8388608
    %v1555 = vsub.s32 0, %v1554
    %v1556 = vadd.s32 %v1551, 1
    %vm1557 = vcmp.gt.s32.totalorder %v1556, 0
    %v1558 = vsel %vm1557, %v1556, 0
    %v1559 = vshrl.u32 %v1558, 5
    %v1560 = vand.u32 %v1558, 31
    %v1561 = vsub.s32 32, %v1560
    %v1562 = vshrl.u32 683565275, %v1561
    %v1563 = vshll.u32 683565275, %v1560
    %v1564 = vshrl.u32 2475754826, %v1561
    %v1565 = vor.u32 %v1563, %v1564
    %v1566 = vshll.u32 2475754826, %v1560
    %v1567 = vshrl.u32 2131351028, %v1561
    %v1568 = vor.u32 %v1566, %v1567
    %v1569 = vshll.u32 2131351028, %v1560
    %v1570 = vshrl.u32 2102212464, %v1561
    %v1571 = vor.u32 %v1569, %v1570
    %v1572 = vshll.u32 2102212464, %v1560
    %v1573 = vshrl.u32 920167782, %v1561
    %v1574 = vor.u32 %v1572, %v1573
    %v1575 = vshll.u32 920167782, %v1560
    %v1576 = vshrl.u32 1326507024, %v1561
    %v1577 = vor.u32 %v1575, %v1576
    %vm1578 = vcmp.lt.s32.totalorder %v1559, 1
    %vm1579 = vcmp.lt.s32.totalorder %v1559, 2
    %vm1580 = vcmp.lt.s32.totalorder %v1559, 3
    %vm1581 = vcmp.lt.s32.totalorder %v1559, 4
    %v1582 = vsel %vm1578, %v1562, %v1565
    %v1583 = vsel %vm1581, %v1571, 2102212464
    %v1584 = vsel %vm1580, %v1568, %v1583
    %v1585 = vsel %vm1579, %v1582, %v1584
    %v1586 = vsel %vm1578, %v1565, %v1568
    %v1587 = vsel %vm1581, %v1574, 920167782
    %v1588 = vsel %vm1580, %v1571, %v1587
    %v1589 = vsel %vm1579, %v1586, %v1588
    %v1590 = vsel %vm1578, %v1568, %v1571
    %v1591 = vsel %vm1581, %v1577, 1326507024
    %v1592 = vsel %vm1580, %v1574, %v1591
    %v1593 = vsel %vm1579, %v1590, %v1592
    %v1594 = vshll.u32 %v1554, 8
    %v1595 = vmul.u32.u64.compose %v1594, %v1593
    %v1596 = vextract.low.u32 %v1595
    %v1597 = vextract.high.u32 %v1595
    %v1598 = vmul.u32.u64.compose %v1594, %v1589
    %v1599 = vextract.low.u32 %v1598
    %v1600 = vextract.high.u32 %v1598
    %v1601 = vmul.u32 %v1594, %v1585
    %v1602 = vadd.s32 %v1597, %v1599
    %vm1603 = vc.u32 %v1597, %v1599
    %v1604 = vadd.s32 %v1600, 1
    %v1605 = vsel %vm1603, %v1604, %v1600
    %v1606 = vadd.s32 %v1601, %v1605
    %v1607 = vadd.s32 %v1606, 536870912
    %v1608 = vshrl.u32 %v1607, 30
    %v1609 = vshll.u32 %v1608, 30
    %v1610 = vsub.s32 %v1606, %v1609
    %vm1611 = vcmp.lt.s32.totalorder %v1610, 0
    %v1612 = vsub.s32 0, %v1610
    %v1613 = vsel %vm1611, %v1612, %v1610
    %v1614 = vclz %v1613
    %v1615 = vsub.s32 %v1614, 2
    %vm1616 = vcmp.gt.s32.totalorder 0, %v1615
    %v1617 = vsel %vm1616, 0, %v1615
    %v1618 = vsub.s32 32, %v1617
    %v1619 = vshll.u32 %v1610, %v1617
    %v1620 = vshrl.u32 %v1602, %v1618
    %v1621 = vor.u32 %v1619, %v1620
    %v1622 = vsub.s32 4294967266, %v1617
    %v1623 = vadd.s32 %v1622, 127
    %v1624 = vshll.u32 %v1623, 23
    %v1625 = vor.u32 4788187, %v1624
    %v1626 = vand.u32 2147483647, %v1625
    %v1628 = vcvt.s32.f32 %v1621
    %v1629 = vmul.f32 %v1628, %v1626
    %v1630 = vxor.u32 %v1629, 2147483648
    %v1631 = vsel %vm1548, %v1630, %v1629
    %v1632 = vsub.s32 4, %v1608
    %v1633 = vsel %vm1548, %v1632, %v1608
    %v1634 = vsel %vm1547, %v412, %v1631
    %v1635 = vsel %vm1547, 0, %v1633
    %v1636 = vcosq.f32.pop %v1634
    %v1637 = vsinq.f32.pop %v1634
    %vm1638 = vweird.f32 %v412
    %v1639 = vand.u32 %v1635, 3
    %vm1640 = vcmp.lt.s32.totalorder %v1639, 2
    %vm1641 = vcmp.eq.s32.totalorder %v1639, 0
    %v1642 = vxor.u32 %v1637, 2147483648
    %v1643 = vsel %vm1641, %v1636, %v1642
    %vm1644 = vcmp.eq.s32.totalorder %v1639, 2
    %v1645 = vxor.u32 %v1636, 2147483648
    %v1646 = vsel %vm1644, %v1645, %v1637
    %v1647 = vsel %vm1640, %v1643, %v1646
    %v1648 = vsel %vm1638, nan, %v1647
    %v1649 = vmul.f32 %v515, 0.088388346
    %v1650 = vmul.f32 %v618, 0.088388346
    %v1651 = vmul.f32 %v721, 0.088388346
    %v1652 = vmul.f32 %v824, 0.088388346
    %v1653 = vmul.f32 %v927, 0.088388346
    %v1654 = vmul.f32 %v1030, 0.088388346
    %v1655 = vmul.f32 %v1133, 0.088388346
    %v1656 = vmul.f32 %v1236, 0.088388346
    %v1657 = vmul.f32 %v1339, 0.088388346
    %v1658 = vmul.f32 %v1442, 0.088388346
    %v1659 = vmul.f32 %v1545, 0.088388346
    %v1660 = vmul.f32 %v1648, 0.088388346
    %1661 = vst [vmem:[#allocation5] sm:$0xff] %v1649
    %1662 = vst [vmem:[#allocation5 + $0x8] sm:$0xff] %v1650
    %1663 = vst [vmem:[#allocation5 + $0x10] sm:$0xff] %v1651
    %1664 = vst [vmem:[#allocation5 + $0x18] sm:$0xff] %v1652
    %1665 = vst [vmem:[#allocation5 + $0x20] sm:$0xff] %v1653
    %1666 = vst [vmem:[#allocation5 + $0x28] sm:$0xff] %v1654
    %1667 = vst [vmem:[#allocation5 + $0x30] sm:$0xff] %v1655
    %1668 = vst [vmem:[#allocation5 + $0x38] sm:$0xff] %v1656
    %1669 = vst [vmem:[#allocation5 + $0x40] sm:$0xff] %v1657
    %1670 = vst [vmem:[#allocation5 + $0x48] sm:$0xff] %v1658
    %1671 = vst [vmem:[#allocation5 + $0x50] sm:$0xff] %v1659
    %1672 = vst [vmem:[#allocation5 + $0x58] sm:$0xff] %v1660
    // Predicated region
    $region18: #{apply.1} parent=1 // pred_check
      _
    $region19: #{apply.1} parent=1 // pred_check_branch
      %1674 = sbr.rel (0) target = $region21
    $region20: #{apply.1} parent=1 // pred_region
      %s1676 = ssub.s32 1536, 1536
      %1677 = vsyncadd [#allocation4], %s1676
      %s1678 = sshll.u32 [#allocation5], 4
      %s1679 = int_to_ptr.vmem [resolvable:$true] %s1678
      %1684 = dma.vmem_to_hbm [thread:$0]  %s1679, 1536, %s3, [#allocation4], 768, 768, 48
    $region21: #{apply.1} parent=1 // pred_fallthru
      _
    // Predicated region
    $region22: #{apply.1} parent=1 // pred_check
      _
    $region23: #{apply.1} parent=1 // pred_check_branch
      %1686 = sbr.rel (0) target = $region25
    $region24: #{apply.1} parent=1 // pred_region
      %1687 = dma.done [#allocation4], 1536
    $region25: #{apply.1} parent=1 // pred_fallthru
      _
    %1688 = vsyncpa [#allocation3], 1
    %1689 = vsyncpa [#allocation4], 1

</llo_original>
